<compile_context>
chip_gen: v6e
topology: v6e:2x2x1
jax: 0.10.0
libtpu: 0.0.40
codegen_flags: <defaults>
</compile_context>

<pallas_src>
import functools

import numpy as np
import jax
import jax.numpy as jnp
from jax.experimental import pallas as pl
from jax.experimental.pallas import tpu as pltpu


def _round_up(x, m):
    return ((x + m - 1) // m) * m


_VMEM_LIMIT = 48 * 1024 * 1024       # comfortably under v7x's 64 MiB VMEM
_W_BLOCK_BUDGET = 12 * 1024 * 1024   # single weight-block (bf16) budget
_CT_PREF_CACHE = None


def _cout_tile_pref():
    """256-wide Cout tiles for v6e/v7x (2x256x256 MXU); 128 for v5e (4x128^2)."""
    global _CT_PREF_CACHE
    if _CT_PREF_CACHE is None:
        pref = 256
        try:
            kind = jax.devices()[0].device_kind.lower()
            if "v5 lite" in kind or "v5lite" in kind or "v5e" in kind:
                pref = 128
        except Exception:
            pref = 256
        _CT_PREF_CACHE = pref
    return _CT_PREF_CACHE


# ----------------------- padded-wide activation layout -----------------------

def to_padded_wide(x_nhwc):
    """(N,H,W,C) -> (N,(H+2)*Wp,C) bf16 zero-halo row-flattened layout."""
    N, H, W, C = x_nhwc.shape
    Wp = _round_up(W + 2, 8)
    assert Wp >= W + 2
    xw = jnp.pad(x_nhwc.astype(jnp.bfloat16),
                 ((0, 0), (1, 1), (1, Wp - W - 1), (0, 0)))
    return xw.reshape(N, (H + 2) * Wp, C)


def from_padded_wide(xw, H, W, C):
    """(N,(H+2)*Wp,Cp) -> (N,H,W,C): drop halo rows/cols and channel padding."""
    N = xw.shape[0]
    Wp = _round_up(W + 2, 8)
    x = xw.reshape(N, H + 2, Wp, xw.shape[-1])
    return x[:, 1:H + 1, 1:W + 1, :C]


# ----------------------------- Pallas kernels ------------------------------

def _tap_matmul(slabs, w_ref, M):
    """3x3 conv taps for one image, already shifted into the padded-column
    frame of the *next* layer: out[m] = y[m-1] with y the conv result.

    slabs: three (M, ck) bf16 dy-shifted row slabs (sublane-aligned slices).
    w_ref: (9, ck, ct) bf16 weights, tap-major (tap = dy*3 + dx).
    """
    def col(dx):
        p = jnp.dot(slabs[0], w_ref[dx], preferred_element_type=jnp.float32)
        p = p + jnp.dot(slabs[1], w_ref[3 + dx],
                        preferred_element_type=jnp.float32)
        p = p + jnp.dot(slabs[2], w_ref[6 + dx],
                        preferred_element_type=jnp.float32)
        return p

    p0, p1, p2 = col(0), col(1), col(2)
    # out[m] = p0[m-1] + p1[m] + p2[m+1]: two XLU rolls per step, wrapped
    # elements only ever land in masked halo positions (Wp >= W + 2).
    return pltpu.roll(p0, 1, 0) + p1 + pltpu.roll(p2, M - 1, 0)


def _bn_mask_store(o_ref, n, acc, scale, shift, *, H, W, Wp, relu):
    """Folded-BN + ReLU epilogue; writes the padded-wide output block for
    image n with zero halo rows and zero pad columns."""
    M = H * Wp
    y = acc * scale + shift
    if relu:
        y = jnp.maximum(y, 0.0)
    # Keep only padded columns 1..W (real data); column 0 / >= W+1 must be
    # zero so the next conv (and the wrap-around garbage) stay correct.
    col = jax.lax.broadcasted_iota(jnp.int32, (M, 1), 0) % Wp
    keep = jnp.logical_and(col >= 1, col <= W).astype(jnp.float32)
    y = y * keep
    ct = o_ref.shape[-1]
    zrow = jnp.zeros((Wp, ct), o_ref.dtype)
    o_ref[n, pl.ds(0, Wp), :] = zrow                     # top halo row
    o_ref[n, pl.ds(Wp, M), :] = y.astype(o_ref.dtype)    # data rows 1..H
    o_ref[n, pl.ds(Wp + M, Wp), :] = zrow                # bottom halo row


def _conv3x3_bn_act_kernel(x_ref, w_ref, scale_ref, shift_ref, o_ref,
                           *, H, W, Wp, relu):
    """Whole-Cin path.  Grid = (Cout tiles, N): batch inner & parallel, weight
    block index independent of n so weights are fetched once per Cout tile."""
    M = H * Wp
    slabs = [x_ref[0, pl.ds(dy * Wp, M), :] for dy in range(3)]
    y = _tap_matmul(slabs, w_ref, M)
    _bn_mask_store(o_ref, 0, y, scale_ref[...], shift_ref[...],
                   H=H, W=W, Wp=Wp, relu=relu)


def _conv3x3_bn_act_acc_kernel(x_ref, w_ref, scale_ref, shift_ref, o_ref,
                               acc_ref, *, H, W, Wp, N, relu):
    """Large-Cin fallback.  Grid = (Cout tiles, Cin tiles); the whole batch is
    blocked so weights are still fetched exactly once; persistent f32 acc."""
    k = pl.program_id(1)
    M = H * Wp

    @pl.when(k == 0)
    def _init():
        acc_ref[...] = jnp.zeros_like(acc_ref)

    for n in range(N):
        slabs = [x_ref[n, pl.ds(dy * Wp, M), :] for dy in range(3)]
        acc_ref[n] += _tap_matmul(slabs, w_ref, M)

    @pl.when(k == pl.num_programs(1) - 1)
    def _finalize():
        for n in range(N):
            _bn_mask_store(o_ref, n, acc_ref[n], scale_ref[...],
                           shift_ref[...], H=H, W=W, Wp=Wp, relu=relu)


def conv3x3_bn_act_pw(xw, H, W, w, scale, shift, relu=True):
    """Fused 3x3 conv (pad=1) + folded BatchNorm + optional ReLU.

    xw:    (N, (H+2)*Wp, Cin_arr) bf16 padded-wide input (extra zero channels
           beyond the real Cin are allowed and ignored).
    w:     (9, Cin, Cout) f32 weights, tap-major.
    scale: (1, Cout) f32 = gamma / sqrt(var + eps)
    shift: (1, Cout) f32 = beta + (bias - mean) * scale
    Returns (N, (H+2)*Wp, Cout_p) bf16 padded-wide output, Cout_p = Cout
    rounded up to 128 (padded channels are exactly zero).
    """
    N, R, Cin_arr = xw.shape
    Wp = _round_up(W + 2, 8)
    assert Wp >= W + 2 and R == (H + 2) * Wp
    _, Cin, Cout = w.shape
    assert Cin_arr >= Cin
    Cout_p = _round_up(Cout, 128)
    ct = 256 if (_cout_tile_pref() == 256 and Cout_p % 256 == 0) else 128
    Jt = Cout_p // ct
    M = H * Wp

    wf = jnp.pad(w.astype(jnp.bfloat16),
                 ((0, 0), (0, Cin_arr - Cin), (0, Cout_p - Cout)))
    sp = jnp.pad(scale, ((0, 0), (0, Cout_p - Cout)))
    bp = jnp.pad(shift, ((0, 0), (0, Cout_p - Cout)))
    common = dict(H=H, W=W, Wp=Wp, relu=relu)

    if 9 * Cin_arr * ct * 2 <= _W_BLOCK_BUDGET:
        # Whole-Cin contraction: one MXU pass per (Cout tile, image); weights
        # DMA'd exactly once and reused across the batch.
        kernel = functools.partial(_conv3x3_bn_act_kernel, **common)
        return pl.pallas_call(
            kernel,
            out_shape=jax.ShapeDtypeStruct((N, R, Cout_p), jnp.bfloat16),
            grid_spec=pltpu.PrefetchScalarGridSpec(
                num_scalar_prefetch=0,
                grid=(Jt, N),
                in_specs=[
                    pl.BlockSpec((1, R, Cin_arr), lambda j, n: (n, 0, 0)),
                    pl.BlockSpec((9, Cin_arr, ct), lambda j, n: (0, 0, j)),
                    pl.BlockSpec((1, ct), lambda j, n: (0, j)),
                    pl.BlockSpec((1, ct), lambda j, n: (0, j)),
                ],
                out_specs=pl.BlockSpec((1, R, ct), lambda j, n: (n, 0, j)),
            ),
            compiler_params=pltpu.CompilerParams(
                dimension_semantics=("parallel", "parallel"),
                vmem_limit_bytes=_VMEM_LIMIT,
            ),
        )(xw, wf, sp, bp)

    # Large-Cin fallback: tile the reduction (ck a multiple of 128 so the
    # activation block stays lane-legal); batch blocked, persistent f32 acc.
    ck = 512
    Kt = pl.cdiv(Cin_arr, ck)
    Cin_p = Kt * ck
    xw = jnp.pad(xw, ((0, 0), (0, 0), (0, Cin_p - Cin_arr)))
    wf = jnp.pad(wf, ((0, 0), (0, Cin_p - Cin_arr), (0, 0)))
    kernel = functools.partial(_conv3x3_bn_act_acc_kernel, N=N, **common)
    return pl.pallas_call(
        kernel,
        out_shape=jax.ShapeDtypeStruct((N, R, Cout_p), jnp.bfloat16),
        grid_spec=pltpu.PrefetchScalarGridSpec(
            num_scalar_prefetch=0,
            grid=(Jt, Kt),
            in_specs=[
                pl.BlockSpec((N, R, ck), lambda j, k: (0, 0, k)),
                pl.BlockSpec((9, ck, ct), lambda j, k: (0, k, j)),
                pl.BlockSpec((1, ct), lambda j, k: (0, j)),
                pl.BlockSpec((1, ct), lambda j, k: (0, j)),
            ],
            out_specs=pl.BlockSpec((N, R, ct), lambda j, k: (0, 0, j)),
            scratch_shapes=[pltpu.VMEM((N, M, ct), jnp.float32)],
        ),
        compiler_params=pltpu.CompilerParams(
            dimension_semantics=("parallel", "arbitrary"),
            vmem_limit_bytes=_VMEM_LIMIT,
        ),
    )(xw, wf, sp, bp)


def _matmul_bias_kernel(x_ref, w_ref, b_ref, o_ref):
    o_ref[...] = (jnp.dot(x_ref[...], w_ref[...],
                          preferred_element_type=jnp.float32)
                  + b_ref[...]).astype(o_ref.dtype)


def matmul_bias(x, w, b):
    """x: (M,K); w: (K,Cout); b: (Cout,).  Lane-dense Pallas matmul + bias
    (Cout zero-padded to a multiple of 128, sliced back here)."""
    M, K = x.shape
    Cout = w.shape[-1]
    Cp = _round_up(Cout, 128)
    wp = jnp.pad(w.astype(jnp.bfloat16), ((0, 0), (0, Cp - Cout)))
    bp = jnp.pad(b, (0, Cp - Cout)).reshape(1, Cp)
    out = pl.pallas_call(
        _matmul_bias_kernel,
        out_shape=jax.ShapeDtypeStruct((M, Cp), jnp.float32),
        grid=(1,),
        in_specs=[
            pl.BlockSpec((M, K), lambda i: (0, 0)),
            pl.BlockSpec((K, Cp), lambda i: (0, 0)),
            pl.BlockSpec((1, Cp), lambda i: (0, 0)),
        ],
        out_specs=pl.BlockSpec((M, Cp), lambda i: (0, 0)),
    )(x.astype(jnp.bfloat16), wp, bp)
    return out[:, :Cout]


# ------------------------------- JAX glue -----------------------------------

def get_mesh_nhwc(n, h, w):
    # torch get_mesh: channel 0 varies along W (mg_x), channel 1 along H (mg_y)
    mg_x = jnp.broadcast_to(jnp.linspace(0.0, 1.0, w)[None, :], (h, w))
    mg_y = jnp.broadcast_to(jnp.linspace(0.0, 1.0, h)[:, None], (h, w))
    mesh = jnp.stack([mg_x, mg_y], axis=-1).astype(jnp.float32)   # (H,W,2)
    return jnp.broadcast_to(mesh[None], (n, h, w, 2))


def maxpool2x2(x):
    n, h, w, c = x.shape
    return x.reshape(n, h // 2, 2, w // 2, 2, c).max(axis=(2, 4))


def _ac_coords(n_in, n_out):
    # align_corners=True sampling coordinates
    if n_in == 1:
        zi = jnp.zeros((n_out,), jnp.int32)
        return jnp.zeros((n_out,), jnp.float32), zi, zi
    src = jnp.arange(n_out, dtype=jnp.float32) * (n_in - 1) / (n_out - 1)
    i0 = jnp.clip(jnp.floor(src).astype(jnp.int32), 0, n_in - 2)
    frac = src - i0.astype(jnp.float32)
    return frac, i0, i0 + 1


def upsample2x_bilinear_align_corners(x):
    n, h, w, c = x.shape
    fy, y0, y1 = _ac_coords(h, 2 * h)
    fx, x0, x1 = _ac_coords(w, 2 * w)
    xf = x.astype(jnp.float32)                      # blend in f32, store bf16
    r0 = jnp.take(xf, y0, axis=1)
    r1 = jnp.take(xf, y1, axis=1)

    def interp_w(row):
        a = jnp.take(row, x0, axis=2)
        b = jnp.take(row, x1, axis=2)
        return a * (1 - fx)[None, None, :, None] + b * fx[None, None, :, None]

    top, bot = interp_w(r0), interp_w(r1)
    out = top * (1 - fy)[None, :, None, None] + bot * fy[None, :, None, None]
    return out.astype(jnp.bfloat16)


def double_conv_apply(p, x_nhwc):
    N, H, W, _ = x_nhwc.shape
    xw = to_padded_wide(x_nhwc)
    yw = conv3x3_bn_act_pw(xw, H, W, *p["a"], relu=True)
    zw = conv3x3_bn_act_pw(yw, H, W, *p["b"], relu=True)   # consumes padded-wide
    return from_padded_wide(zw, H, W, p["b"][0].shape[-1])


def up_apply(p, x1, x2):
    x1 = upsample2x_bilinear_align_corners(x1)              # bf16
    diff_y = x2.shape[1] - x1.shape[1]
    diff_x = x2.shape[2] - x1.shape[2]
    x1 = jnp.pad(x1, ((0, 0),
                      (diff_y // 2, diff_y - diff_y // 2),
                      (diff_x // 2, diff_x - diff_x // 2),
                      (0, 0)))
    x = jnp.concatenate([x2.astype(jnp.bfloat16), x1], axis=-1)
    return double_conv_apply(p, x)


def backbone_features(p, x_nhwc):
    # Stand-in for EfficientNet-b0 extract_features: (N, H/32, W/32, 1280).
    # The projection is M=2, K=3 — far below one MXU tile, so plain JAX.
    n, h, w, c = x_nhwc.shape
    hs, ws = h // 32, w // 32
    pooled = x_nhwc.reshape(n, hs, 32, ws, 32, c).mean(axis=(2, 4))
    return jnp.einsum("nhwc,cf->nhwf", pooled, p["w"]) + p["b"]


def conv1x1(p, x):
    n, h, w, c = x.shape
    out = matmul_bias(x.reshape(n * h * w, c), p["w"], p["b"])
    return out.reshape(n, h, w, -1)


def myunet_forward(params, x_nchw):
    x = jnp.transpose(x_nchw, (0, 2, 3, 1)).astype(jnp.float32)   # NCHW -> NHWC
    n, h, w, _ = x.shape

    mesh1 = get_mesh_nhwc(n, h, w)
    x0 = jnp.concatenate([x, mesh1], axis=-1).astype(jnp.bfloat16)  # 5 ch

    x1 = maxpool2x2(double_conv_apply(params["conv0"], x0))
    x2 = maxpool2x2(double_conv_apply(params["conv1"], x1))
    x3 = maxpool2x2(double_conv_apply(params["conv2"], x2))
    x4 = maxpool2x2(double_conv_apply(params["conv3"], x3))

    feats = backbone_features(params["backbone"], x)              # 1280 ch
    mesh2 = get_mesh_nhwc(n, feats.shape[1], feats.shape[2])
    feats = jnp.concatenate([feats, mesh2], axis=-1)              # 1282 ch

    xu = up_apply(params["up1"], feats, x4)                       # -> 512 ch
    xu = up_apply(params["up2"], xu, x3)                          # -> 256 ch
    out = conv1x1(params["outc"], xu)                             # -> 8 classes
    return jnp.transpose(out, (0, 3, 1, 2))                       # NHWC -> NCHW


# --------------------------- parameter creation ------------------------------

def _make_conv_bn(key, cin, cout):
    k1, k2, k3, k4, k5 = jax.random.split(key, 5)
    w = jax.random.normal(k1, (3, 3, cin, cout), jnp.float32) / np.sqrt(9.0 * cin)
    b = 0.01 * jax.random.normal(k2, (cout,), jnp.float32)
    gamma = 1.0 + 0.1 * jax.random.normal(k3, (cout,), jnp.float32)
    beta = 0.1 * jax.random.normal(k4, (cout,), jnp.float32)
    running_mean = 0.1 * jax.random.normal(k5, (cout,), jnp.float32)
    running_var = jnp.ones((cout,), jnp.float32)
    eps = 1e-5
    scale = gamma / jnp.sqrt(running_var + eps)
    shift = beta + (b - running_mean) * scale
    return (w.reshape(9, cin, cout), scale.reshape(1, cout), shift.reshape(1, cout))


def _make_double_conv(key, cin, cout):
    ka, kb = jax.random.split(key)
    return {"a": _make_conv_bn(ka, cin, cout), "b": _make_conv_bn(kb, cout, cout)}


def init_params(key):
    keys = jax.random.split(key, 10)
    n_classes = 8
    feat_ch = 1280   # EfficientNet-b0 extract_features channels (effnet_ver='b0')
    return {
        "conv0": _make_double_conv(keys[0], 5, 64),
        "conv1": _make_double_conv(keys[1], 64, 128),
        "conv2": _make_double_conv(keys[2], 128, 512),
        "conv3": _make_double_conv(keys[3], 512, 1024),
        "up1": _make_double_conv(keys[4], (feat_ch + 2) + 1024, 512),
        "up2": _make_double_conv(keys[5], 512 + 512, 256),
        "outc": {
            "w": jax.random.normal(keys[6], (256, n_classes), jnp.float32) / np.sqrt(256.0),
            "b": 0.01 * jax.random.normal(keys[7], (n_classes,), jnp.float32),
        },
        "backbone": {
            "w": jax.random.normal(keys[8], (3, feat_ch), jnp.float32) / np.sqrt(3.0),
            "b": 0.01 * jax.random.normal(keys[9], (feat_ch,), jnp.float32),
        },
    }


# ---------------------------------- main -------------------------------------

if __name__ == "__main__":
    key = jax.random.PRNGKey(0)
    pkey, xkey = jax.random.split(key)
    params = init_params(pkey)

    # Quick numeric sanity check of the fused conv kernel against lax.conv
    # (same bf16 input quantization; loose tolerance for the bf16 output cast).
    ck1, ck2 = jax.random.split(jax.random.PRNGKey(1))
    xs = jax.random.normal(ck1, (2, 8, 8, 16), jnp.float32)
    wtest, stest, btest = _make_conv_bn(ck2, 16, 32)
    conv_fn = jax.jit(
        lambda xw: conv3x3_bn_act_pw(xw, 8, 8, wtest, stest, btest, True))
    got = from_padded_wide(conv_fn(to_padded_wide(xs)), 8, 8, 32)
    ref = jax.lax.conv_general_dilated(
        xs.astype(jnp.bfloat16).astype(jnp.float32),
        wtest.reshape(3, 3, 16, 32).astype(jnp.bfloat16).astype(jnp.float32),
        window_strides=(1, 1), padding=((1, 1), (1, 1)),
        dimension_numbers=("NHWC", "HWIO", "NHWC"))
    ref = jnp.maximum(ref * stest.reshape(1, 1, 1, -1)
                      + btest.reshape(1, 1, 1, -1), 0.0)
    err = float(jnp.max(jnp.abs(got.astype(jnp.float32) - ref)))
    assert err < 5e-2, err

    # batch=2, RGB, 32x32 (smallest spatial consistent with 5 pooling stages)
    x = jax.random.normal(xkey, (2, 3, 32, 32), jnp.float32)
    out = jax.jit(myunet_forward)(params, x)
    out = jax.block_until_ready(out)
    assert out.shape == (2, 8, 4, 4), out.shape
    assert bool(jnp.all(jnp.isfinite(out)))
    print("KERNEL_OK")
</pallas_src>

<mosaic_0001>
module attributes {stable_mosaic.version = 11 : i64} {
  func.func @_conv3x3_bn_act_kernel(%arg0: i32, %arg1: i32, %arg2: memref<1x160x16xbf16, #tpu.memory_space<vmem>>, %arg3: memref<9x16x128xbf16, #tpu.memory_space<vmem>>, %arg4: memref<1x128xf32, #tpu.memory_space<vmem>>, %arg5: memref<1x128xf32, #tpu.memory_space<vmem>>, %arg6: memref<1x160x128xbf16, #tpu.memory_space<vmem>>) attributes {dimension_semantics = [#tpu.dimension_semantics<parallel>, #tpu.dimension_semantics<parallel>], iteration_bounds = array<i64: 1, 2>, scalar_prefetch = 0 : i64, scratch_operands = 0 : i64, tpu.core_type = #tpu.core_type<tc>, window_params = [{transform_indices = @transform_0, window_bounds = array<i64: 1, 160, 16>}, {transform_indices = @transform_1, window_bounds = array<i64: 9, 16, 128>}, {transform_indices = @transform_2, window_bounds = array<i64: 1, 128>}, {transform_indices = @transform_3, window_bounds = array<i64: 1, 128>}, {transform_indices = @transform_4, window_bounds = array<i64: 1, 160, 128>}]} {
    %c0 = arith.constant 0 : index
    %c0_0 = arith.constant 0 : index
    %c0_1 = arith.constant 0 : index
    %0 = vector.load %arg2[%c0, %c0_0, %c0_1] : memref<1x160x16xbf16, #tpu.memory_space<vmem>>, vector<1x128x16xbf16>
    %1 = vector.shape_cast %0 : vector<1x128x16xbf16> to vector<128x16xbf16>
    %c0_2 = arith.constant 0 : index
    %c16 = arith.constant 16 : index
    %c0_3 = arith.constant 0 : index
    %2 = vector.load %arg2[%c0_2, %c16, %c0_3] : memref<1x160x16xbf16, #tpu.memory_space<vmem>>, vector<1x128x16xbf16>
    %3 = vector.shape_cast %2 : vector<1x128x16xbf16> to vector<128x16xbf16>
    %c0_4 = arith.constant 0 : index
    %c32 = arith.constant 32 : index
    %c0_5 = arith.constant 0 : index
    %4 = vector.load %arg2[%c0_4, %c32, %c0_5] : memref<1x160x16xbf16, #tpu.memory_space<vmem>>, vector<1x128x16xbf16>
    %5 = vector.shape_cast %4 : vector<1x128x16xbf16> to vector<128x16xbf16>
    %c0_6 = arith.constant 0 : index
    %c0_7 = arith.constant 0 : index
    %c0_8 = arith.constant 0 : index
    %6 = vector.load %arg3[%c0_6, %c0_7, %c0_8] : memref<9x16x128xbf16, #tpu.memory_space<vmem>>, vector<1x16x128xbf16>
    %7 = vector.shape_cast %6 : vector<1x16x128xbf16> to vector<16x128xbf16>
    %cst = arith.constant dense<0.000000e+00> : vector<128x128xf32>
    %8 = tpu.matmul %1, %7, %cst {dimension_numbers = #tpu.dot_dimension_numbers<[1], [0], [0], [1], [0, 0, 1, 1], [], []>} : vector<128x16xbf16>, vector<16x128xbf16>, vector<128x128xf32> -> vector<128x128xf32>
    %c3 = arith.constant 3 : index
    %c0_9 = arith.constant 0 : index
    %c0_10 = arith.constant 0 : index
    %9 = vector.load %arg3[%c3, %c0_9, %c0_10] : memref<9x16x128xbf16, #tpu.memory_space<vmem>>, vector<1x16x128xbf16>
    %10 = vector.shape_cast %9 : vector<1x16x128xbf16> to vector<16x128xbf16>
    %cst_11 = arith.constant dense<0.000000e+00> : vector<128x128xf32>
    %11 = tpu.matmul %3, %10, %cst_11 {dimension_numbers = #tpu.dot_dimension_numbers<[1], [0], [0], [1], [0, 0, 1, 1], [], []>} : vector<128x16xbf16>, vector<16x128xbf16>, vector<128x128xf32> -> vector<128x128xf32>
    %12 = arith.addf %8, %11 : vector<128x128xf32>
    %c6 = arith.constant 6 : index
    %c0_12 = arith.constant 0 : index
    %c0_13 = arith.constant 0 : index
    %13 = vector.load %arg3[%c6, %c0_12, %c0_13] : memref<9x16x128xbf16, #tpu.memory_space<vmem>>, vector<1x16x128xbf16>
    %14 = vector.shape_cast %13 : vector<1x16x128xbf16> to vector<16x128xbf16>
    %cst_14 = arith.constant dense<0.000000e+00> : vector<128x128xf32>
    %15 = tpu.matmul %5, %14, %cst_14 {dimension_numbers = #tpu.dot_dimension_numbers<[1], [0], [0], [1], [0, 0, 1, 1], [], []>} : vector<128x16xbf16>, vector<16x128xbf16>, vector<128x128xf32> -> vector<128x128xf32>
    %16 = arith.addf %12, %15 : vector<128x128xf32>
    %c1 = arith.constant 1 : index
    %c0_15 = arith.constant 0 : index
    %c0_16 = arith.constant 0 : index
    %17 = vector.load %arg3[%c1, %c0_15, %c0_16] : memref<9x16x128xbf16, #tpu.memory_space<vmem>>, vector<1x16x128xbf16>
    %18 = vector.shape_cast %17 : vector<1x16x128xbf16> to vector<16x128xbf16>
    %cst_17 = arith.constant dense<0.000000e+00> : vector<128x128xf32>
    %19 = tpu.matmul %1, %18, %cst_17 {dimension_numbers = #tpu.dot_dimension_numbers<[1], [0], [0], [1], [0, 0, 1, 1], [], []>} : vector<128x16xbf16>, vector<16x128xbf16>, vector<128x128xf32> -> vector<128x128xf32>
    %c4 = arith.constant 4 : index
    %c0_18 = arith.constant 0 : index
    %c0_19 = arith.constant 0 : index
    %20 = vector.load %arg3[%c4, %c0_18, %c0_19] : memref<9x16x128xbf16, #tpu.memory_space<vmem>>, vector<1x16x128xbf16>
    %21 = vector.shape_cast %20 : vector<1x16x128xbf16> to vector<16x128xbf16>
    %cst_20 = arith.constant dense<0.000000e+00> : vector<128x128xf32>
    %22 = tpu.matmul %3, %21, %cst_20 {dimension_numbers = #tpu.dot_dimension_numbers<[1], [0], [0], [1], [0, 0, 1, 1], [], []>} : vector<128x16xbf16>, vector<16x128xbf16>, vector<128x128xf32> -> vector<128x128xf32>
    %23 = arith.addf %19, %22 : vector<128x128xf32>
    %c7 = arith.constant 7 : index
    %c0_21 = arith.constant 0 : index
    %c0_22 = arith.constant 0 : index
    %24 = vector.load %arg3[%c7, %c0_21, %c0_22] : memref<9x16x128xbf16, #tpu.memory_space<vmem>>, vector<1x16x128xbf16>
    %25 = vector.shape_cast %24 : vector<1x16x128xbf16> to vector<16x128xbf16>
    %cst_23 = arith.constant dense<0.000000e+00> : vector<128x128xf32>
    %26 = tpu.matmul %5, %25, %cst_23 {dimension_numbers = #tpu.dot_dimension_numbers<[1], [0], [0], [1], [0, 0, 1, 1], [], []>} : vector<128x16xbf16>, vector<16x128xbf16>, vector<128x128xf32> -> vector<128x128xf32>
    %27 = arith.addf %23, %26 : vector<128x128xf32>
    %c2 = arith.constant 2 : index
    %c0_24 = arith.constant 0 : index
    %c0_25 = arith.constant 0 : index
    %28 = vector.load %arg3[%c2, %c0_24, %c0_25] : memref<9x16x128xbf16, #tpu.memory_space<vmem>>, vector<1x16x128xbf16>
    %29 = vector.shape_cast %28 : vector<1x16x128xbf16> to vector<16x128xbf16>
    %cst_26 = arith.constant dense<0.000000e+00> : vector<128x128xf32>
    %30 = tpu.matmul %1, %29, %cst_26 {dimension_numbers = #tpu.dot_dimension_numbers<[1], [0], [0], [1], [0, 0, 1, 1], [], []>} : vector<128x16xbf16>, vector<16x128xbf16>, vector<128x128xf32> -> vector<128x128xf32>
    %c5 = arith.constant 5 : index
    %c0_27 = arith.constant 0 : index
    %c0_28 = arith.constant 0 : index
    %31 = vector.load %arg3[%c5, %c0_27, %c0_28] : memref<9x16x128xbf16, #tpu.memory_space<vmem>>, vector<1x16x128xbf16>
    %32 = vector.shape_cast %31 : vector<1x16x128xbf16> to vector<16x128xbf16>
    %cst_29 = arith.constant dense<0.000000e+00> : vector<128x128xf32>
    %33 = tpu.matmul %3, %32, %cst_29 {dimension_numbers = #tpu.dot_dimension_numbers<[1], [0], [0], [1], [0, 0, 1, 1], [], []>} : vector<128x16xbf16>, vector<16x128xbf16>, vector<128x128xf32> -> vector<128x128xf32>
    %34 = arith.addf %30, %33 : vector<128x128xf32>
    %c8 = arith.constant 8 : index
    %c0_30 = arith.constant 0 : index
    %c0_31 = arith.constant 0 : index
    %35 = vector.load %arg3[%c8, %c0_30, %c0_31] : memref<9x16x128xbf16, #tpu.memory_space<vmem>>, vector<1x16x128xbf16>
    %36 = vector.shape_cast %35 : vector<1x16x128xbf16> to vector<16x128xbf16>
    %cst_32 = arith.constant dense<0.000000e+00> : vector<128x128xf32>
    %37 = tpu.matmul %5, %36, %cst_32 {dimension_numbers = #tpu.dot_dimension_numbers<[1], [0], [0], [1], [0, 0, 1, 1], [], []>} : vector<128x16xbf16>, vector<16x128xbf16>, vector<128x128xf32> -> vector<128x128xf32>
    %38 = arith.addf %34, %37 : vector<128x128xf32>
    %c1_i32 = arith.constant 1 : i32
    %39 = tpu.dynamic_rotate %16 by %c1_i32 dim 0 : vector<128x128xf32>, i32 -> vector<128x128xf32>
    %40 = arith.addf %39, %27 : vector<128x128xf32>
    %c127_i32 = arith.constant 127 : i32
    %41 = tpu.dynamic_rotate %38 by %c127_i32 dim 0 : vector<128x128xf32>, i32 -> vector<128x128xf32>
    %42 = arith.addf %40, %41 : vector<128x128xf32>
    %c0_33 = arith.constant 0 : index
    %c0_34 = arith.constant 0 : index
    %43 = vector.load %arg4[%c0_33, %c0_34] : memref<1x128xf32, #tpu.memory_space<vmem>>, vector<1x128xf32>
    %c0_35 = arith.constant 0 : index
    %c0_36 = arith.constant 0 : index
    %44 = vector.load %arg5[%c0_35, %c0_36] : memref<1x128xf32, #tpu.memory_space<vmem>>, vector<1x128xf32>
    %45 = vector.broadcast %43 : vector<1x128xf32> to vector<128x128xf32>
    %46 = arith.mulf %42, %45 : vector<128x128xf32>
    %47 = vector.broadcast %44 : vector<1x128xf32> to vector<128x128xf32>
    %48 = arith.addf %46, %47 : vector<128x128xf32>
    %cst_37 = arith.constant 0.000000e+00 : f32
    %49 = vector.broadcast %cst_37 : f32 to vector<128x128xf32>
    %50 = arith.maximumf %48, %49 : vector<128x128xf32>
    %51 = tpu.iota {dimensions = array<i32: 0>} : vector<128x1xi32>
    %c16_i32 = arith.constant 16 : i32
    %c0_i32 = arith.constant 0 : i32
    %52 = arith.cmpi eq, %c16_i32, %c0_i32 : i32
    %c1_i32_38 = arith.constant 1 : i32
    %53 = arith.select %52, %c1_i32_38, %c16_i32 : i32
    %54 = vector.broadcast %53 : i32 to vector<128x1xi32>
    %55 = arith.remsi %51, %54 : vector<128x1xi32>
    %c0_i32_39 = arith.constant 0 : i32
    %56 = vector.broadcast %c0_i32_39 : i32 to vector<128x1xi32>
    %57 = arith.cmpi ne, %55, %56 : vector<128x1xi32>
    %c0_i32_40 = arith.constant 0 : i32
    %58 = vector.broadcast %c0_i32_40 : i32 to vector<128x1xi32>
    %59 = arith.cmpi slt, %55, %58 : vector<128x1xi32>
    %c0_i32_41 = arith.constant 0 : i32
    %60 = arith.cmpi slt, %53, %c0_i32_41 : i32
    %61 = vector.broadcast %60 : i1 to vector<128x1xi1>
    %62 = vector.broadcast %61 : vector<128x1xi1> to vector<128x1xi1>
    %63 = arith.xori %59, %62 : vector<128x1xi1>
    %64 = arith.andi %63, %57 : vector<128x1xi1>
    %65 = vector.broadcast %53 : i32 to vector<128x1xi32>
    %66 = arith.addi %55, %65 : vector<128x1xi32>
    %67 = arith.select %64, %66, %55 : vector<128x1xi1>, vector<128x1xi32>
    %c1_i32_42 = arith.constant 1 : i32
    %68 = vector.broadcast %c1_i32_42 : i32 to vector<128x1xi32>
    %69 = arith.cmpi sge, %67, %68 : vector<128x1xi32>
    %c8_i32 = arith.constant 8 : i32
    %70 = vector.broadcast %c8_i32 : i32 to vector<128x1xi32>
    %71 = arith.cmpi sle, %67, %70 : vector<128x1xi32>
    %72 = arith.andi %69, %71 : vector<128x1xi1>
    %73 = arith.extui %72 : vector<128x1xi1> to vector<128x1xi32>
    %74 = arith.sitofp %73 : vector<128x1xi32> to vector<128x1xf32>
    %75 = vector.broadcast %74 : vector<128x1xf32> to vector<128x128xf32>
    %76 = arith.mulf %50, %75 : vector<128x128xf32>
    %cst_43 = arith.constant 0.000000e+00 : bf16
    %77 = vector.broadcast %cst_43 : bf16 to vector<16x128xbf16>
    %c0_44 = arith.constant 0 : index
    %c0_45 = arith.constant 0 : index
    %c0_46 = arith.constant 0 : index
    %78 = vector.load %arg6[%c0_44, %c0_45, %c0_46] : memref<1x160x128xbf16, #tpu.memory_space<vmem>>, vector<1x16x128xbf16>
    %79 = vector.shape_cast %78 : vector<1x16x128xbf16> to vector<16x128xbf16>
    %80 = vector.shape_cast %77 : vector<16x128xbf16> to vector<1x16x128xbf16>
    tpu.vector_store %arg6[%c0_44, %c0_45, %c0_46], %80 {strides = array<i32>} : memref<1x160x128xbf16, #tpu.memory_space<vmem>>, vector<1x16x128xbf16>,
    %81 = arith.truncf %76 : vector<128x128xf32> to vector<128x128xbf16>
    %c0_47 = arith.constant 0 : index
    %c16_48 = arith.constant 16 : index
    %c0_49 = arith.constant 0 : index
    %82 = vector.load %arg6[%c0_47, %c16_48, %c0_49] : memref<1x160x128xbf16, #tpu.memory_space<vmem>>, vector<1x128x128xbf16>
    %83 = vector.shape_cast %82 : vector<1x128x128xbf16> to vector<128x128xbf16>
    %84 = vector.shape_cast %81 : vector<128x128xbf16> to vector<1x128x128xbf16>
    tpu.vector_store %arg6[%c0_47, %c16_48, %c0_49], %84 {strides = array<i32>} : memref<1x160x128xbf16, #tpu.memory_space<vmem>>, vector<1x128x128xbf16>,
    %c0_50 = arith.constant 0 : index
    %c144 = arith.constant 144 : index
    %c0_51 = arith.constant 0 : index
    %85 = vector.load %arg6[%c0_50, %c144, %c0_51] : memref<1x160x128xbf16, #tpu.memory_space<vmem>>, vector<1x16x128xbf16>
    %86 = vector.shape_cast %85 : vector<1x16x128xbf16> to vector<16x128xbf16>
    %87 = vector.shape_cast %77 : vector<16x128xbf16> to vector<1x16x128xbf16>
    tpu.vector_store %arg6[%c0_50, %c144, %c0_51], %87 {strides = array<i32>} : memref<1x160x128xbf16, #tpu.memory_space<vmem>>, vector<1x16x128xbf16>,
    return
  }
  func.func @transform_0(%arg0: i32, %arg1: i32) -> (i32, i32, i32) {
    %c0_i32 = arith.constant 0 : i32
    %c0_i32_0 = arith.constant 0 : i32
    %c0_i32_1 = arith.constant 0 : i32
    return %arg1, %c0_i32, %c0_i32_0 : i32, i32, i32
  }
  func.func @transform_1(%arg0: i32, %arg1: i32) -> (i32, i32, i32) {
    %c0_i32 = arith.constant 0 : i32
    %c0_i32_0 = arith.constant 0 : i32
    %c0_i32_1 = arith.constant 0 : i32
    return %c0_i32, %c0_i32_0, %arg0 : i32, i32, i32
  }
  func.func @transform_2(%arg0: i32, %arg1: i32) -> (i32, i32) {
    %c0_i32 = arith.constant 0 : i32
    %c0_i32_0 = arith.constant 0 : i32
    return %c0_i32, %arg0 : i32, i32
  }
  func.func @transform_3(%arg0: i32, %arg1: i32) -> (i32, i32) {
    %c0_i32 = arith.constant 0 : i32
    %c0_i32_0 = arith.constant 0 : i32
    return %c0_i32, %arg0 : i32, i32
  }
  func.func @transform_4(%arg0: i32, %arg1: i32) -> (i32, i32, i32) {
    %c0_i32 = arith.constant 0 : i32
    %c0_i32_0 = arith.constant 0 : i32
    return %arg1, %c0_i32, %arg0 : i32, i32, i32
  }
}

</mosaic_0001>

<llo_original>
// kernel: _lambda_.1
$region0: #{_lambda_.1}
  #allocation0 [shape = 'u32[]', space=smem, size = 0x4, offset = 0x4, fixed_abs, tag = 'smem constant byte address 0x4 - core index']
  #allocation1 [shape = 'u32[144,128]{1,0:T(1,128)}', space=vmem, size = 0x12000, scoped, tag = 'internal scratch']
  %s0 = inlined_call_operand.vmem [shape: bf16[2,160,16], index: 0, kind: input, shape index: {}]
  %s1 = inlined_call_operand.vmem [shape: bf16[9,16,128], index: 1, kind: input, shape index: {}]
  %s2 = inlined_call_operand.vmem [shape: f32[1,128], index: 2, kind: input, shape index: {}]
  %s3 = inlined_call_operand.vmem [shape: f32[1,128], index: 3, kind: input, shape index: {}]
  %s4 = inlined_call_operand.hbm [shape: bf16[2,160,128], index: 4, kind: output, shape index: {}]
  %s5 = sld [smem:[#allocation0]]
  $region49: #{_lambda_.1} parent=0
    _
  %s7 = ssub.s32 1, %s5
  %s8 = scalar_select 0, %s7, %s5
  $region1: #{_lambda_.1} parent=0
    #allocation2 [shape = 'u8[81920]{0}', space=vmem, size = 0x14000, scoped, tag = 'output window, operand 0']
    #allocation3 [shape = 's32[2]{0}', space=sflag, size = 0x8, scoped, tag = 'scoped memory for _lambda_.1']
    %9 = vsyncpa [#allocation3], 0
    %s10 = scalar_lea.sflag [#allocation3], 1
    %11 = vsyncpa %s10, 0
    loop: start=0, step=1, limit=4
    $region2: #{_lambda_.1} parent=1 // loop_pre_header
      _
    $region3: #{_lambda_.1} parent=1 // loop_header
      %s13 = sphi 0, %s17
      %p14 = scmp.ge.s32.totalorder %s13, 4
      %s20 = sphi 0, %s32
      %s21 = sphi 0, %s28
      %s22 = sphi 0, %s20
      %s23 = sphi 0, %s21
      %s24 = sphi 0, %s22
      %s25 = sphi 0, %s23
      %s35 = sphi 0, %s37
      %s38 = sphi 0, %s35
      %s39 = sphi 0, %s38
      %s55 = sphi 0, %s39
      %s61 = sphi 0, %s63
      %s64 = sphi 0, %s61
      %s65 = sphi 0, %s64
      %s81 = sphi 0, %s65
      %s87 = sphi 0, %s89
      %s90 = sphi 0, %s87
      %s91 = sphi 0, %s90
      %s107 = sphi 0, %s91
      %s113 = sphi 0, %s115
      %s116 = sphi 0, %s113
      %s117 = sphi 0, %s116
      %s133 = sphi 0, %s117
      %s141 = sphi 0, %s143
      %s144 = sphi 0, %s141
      %s145 = sphi 0, %s144
      %s161 = sphi 0, %s145
    $region4: #{_lambda_.1} parent=1 // loop_header_branch
      %16 = sbr.rel (%p14) target = $region8
    $region5: #{_lambda_.1} parent=1 // loop_body
      %s18 = ssub.s32 %s13, 1
      %s19 = ssub.s32 %s13, 2
      %s26 = sadd.s32 1, %s21
      %p27 = scmp.ge.s32.totalorder %s26, 2
      %s28 = scalar_select %p27, 0, %s26
      %s29 = sadd.s32 1, %s20
      %s30 = scalar_select %p27, %s29, %s20
      %p31 = scmp.ge.s32.totalorder %s30, 1
      %s32 = scalar_select %p31, 0, %s30
      %s33 = ssub.s32 %s21, %s28
      %p34 = scmp.eq.s32.totalorder %s33, 0
      %s36 = sadd.s32 %s35, 1
      %s37 = scalar_select %p34, %s35, %s36
      %p40 = pneg %p34
      %p41 = scmp.eq.s32.totalorder %s13, 1
      %p42 = por %p40, %p41
      %p43 = scmp.ne.s32.totalorder %s35, %s38
      %p44 = scmp.eq.s32.totalorder %s13, 0
      %p45 = por %p43, %p44
      %p46 = scmp.ne.s32.totalorder %s35, %s38
      %p47 = scmp.eq.s32.totalorder %s18, 1
      %p48 = por %p46, %p47
      %p49 = scmp.ne.s32.totalorder %s38, %s39
      %p50 = scmp.eq.s32.totalorder %s18, 0
      %p51 = por %p49, %p50
      %p52 = scmp.ne.s32.totalorder %s38, %s39
      %p53 = scmp.eq.s32.totalorder %s19, 1
      %p54 = por %p52, %p53
      %p56 = scmp.ne.s32.totalorder %s39, %s55
      %p57 = scmp.eq.s32.totalorder %s19, 0
      %p58 = por %p56, %p57
      %s59 = ssub.s32 %s20, %s32
      %p60 = scmp.eq.s32.totalorder %s59, 0
      %s62 = sadd.s32 %s61, 1
      %s63 = scalar_select %p60, %s61, %s62
      %p66 = pneg %p60
      %p67 = scmp.eq.s32.totalorder %s13, 1
      %p68 = por %p66, %p67
      %p69 = scmp.ne.s32.totalorder %s61, %s64
      %p70 = scmp.eq.s32.totalorder %s13, 0
      %p71 = por %p69, %p70
      %p72 = scmp.ne.s32.totalorder %s61, %s64
      %p73 = scmp.eq.s32.totalorder %s18, 1
      %p74 = por %p72, %p73
      %p75 = scmp.ne.s32.totalorder %s64, %s65
      %p76 = scmp.eq.s32.totalorder %s18, 0
      %p77 = por %p75, %p76
      %p78 = scmp.ne.s32.totalorder %s64, %s65
      %p79 = scmp.eq.s32.totalorder %s19, 1
      %p80 = por %p78, %p79
      %p82 = scmp.ne.s32.totalorder %s65, %s81
      %p83 = scmp.eq.s32.totalorder %s19, 0
      %p84 = por %p82, %p83
      %s85 = ssub.s32 %s20, %s32
      %p86 = scmp.eq.s32.totalorder %s85, 0
      %s88 = sadd.s32 %s87, 1
      %s89 = scalar_select %p86, %s87, %s88
      %p92 = pneg %p86
      %p93 = scmp.eq.s32.totalorder %s13, 1
      %p94 = por %p92, %p93
      %p95 = scmp.ne.s32.totalorder %s87, %s90
      %p96 = scmp.eq.s32.totalorder %s13, 0
      %p97 = por %p95, %p96
      %p98 = scmp.ne.s32.totalorder %s87, %s90
      %p99 = scmp.eq.s32.totalorder %s18, 1
      %p100 = por %p98, %p99
      %p101 = scmp.ne.s32.totalorder %s90, %s91
      %p102 = scmp.eq.s32.totalorder %s18, 0
      %p103 = por %p101, %p102
      %p104 = scmp.ne.s32.totalorder %s90, %s91
      %p105 = scmp.eq.s32.totalorder %s19, 1
      %p106 = por %p104, %p105
      %p108 = scmp.ne.s32.totalorder %s91, %s107
      %p109 = scmp.eq.s32.totalorder %s19, 0
      %p110 = por %p108, %p109
      %s111 = ssub.s32 %s20, %s32
      %p112 = scmp.eq.s32.totalorder %s111, 0
      %s114 = sadd.s32 %s113, 1
      %s115 = scalar_select %p112, %s113, %s114
      %p118 = pneg %p112
      %p119 = scmp.eq.s32.totalorder %s13, 1
      %p120 = por %p118, %p119
      %p121 = scmp.ne.s32.totalorder %s113, %s116
      %p122 = scmp.eq.s32.totalorder %s13, 0
      %p123 = por %p121, %p122
      %p124 = scmp.ne.s32.totalorder %s113, %s116
      %p125 = scmp.eq.s32.totalorder %s18, 1
      %p126 = por %p124, %p125
      %p127 = scmp.ne.s32.totalorder %s116, %s117
      %p128 = scmp.eq.s32.totalorder %s18, 0
      %p129 = por %p127, %p128
      %p130 = scmp.ne.s32.totalorder %s116, %s117
      %p131 = scmp.eq.s32.totalorder %s19, 1
      %p132 = por %p130, %p131
      %p134 = scmp.ne.s32.totalorder %s117, %s133
      %p135 = scmp.eq.s32.totalorder %s19, 0
      %p136 = por %p134, %p135
      %s137 = ssub.s32 %s21, %s28
      %s138 = ssub.s32 %s20, %s32
      %s139 = sor.u32 %s137, %s138
      %p140 = scmp.eq.s32.totalorder %s139, 0
      %s142 = sadd.s32 %s141, 1
      %s143 = scalar_select %p140, %s141, %s142
      %p146 = pneg %p140
      %p147 = scmp.eq.s32.totalorder %s13, 1
      %p148 = por %p146, %p147
      %p149 = scmp.ne.s32.totalorder %s141, %s144
      %p150 = scmp.eq.s32.totalorder %s13, 0
      %p151 = por %p149, %p150
      %p152 = scmp.ne.s32.totalorder %s141, %s144
      %p153 = scmp.eq.s32.totalorder %s18, 1
      %p154 = por %p152, %p153
      %p155 = scmp.ne.s32.totalorder %s144, %s145
      %p156 = scmp.eq.s32.totalorder %s18, 0
      %p157 = por %p155, %p156
      %p158 = scmp.ne.s32.totalorder %s144, %s145
      %p159 = scmp.eq.s32.totalorder %s19, 1
      %p160 = por %p158, %p159
      %p162 = scmp.ne.s32.totalorder %s145, %s161
      %p163 = scmp.eq.s32.totalorder %s19, 0
      %p164 = por %p162, %p163
      %p165 = scmp.le.s32.totalorder 1, %s13
      %p166 = scmp.lt.s32.totalorder %s13, 3
      %p167 = pnand %p165, %p166
      %p168 = pneg %p167
      // Predicated region
      $region9: #{_lambda_.1} parent=5 // pred_check
        _
      $region10: #{_lambda_.1} parent=5 // pred_check_branch
        %170 = sbr.rel (%p167) target = $region12
      $region11: #{_lambda_.1} parent=5 // pred_region
        %s171 = ssub.s32 %s13, 1
        // Predicated region
        $region13: #{_lambda_.1} parent=11 // pred_check
          %p172 = pneg %p77
        $region14: #{_lambda_.1} parent=11 // pred_check_branch
          %174 = sbr.rel (%p172) target = $region16
        $region15: #{_lambda_.1} parent=11 // pred_region
          %p175 = scmp.lt.s32.totalorder %s22, 0
          %s176 = scalar_select %p175, %s22, 0
          %s177 = smul.addr %s176, 4
          %s178 = scalar_lea.vmem %s1, %s177
        $region16: #{_lambda_.1} parent=11 // pred_fallthru
          _
        // Predicated region
        $region17: #{_lambda_.1} parent=11 // pred_check
          %p179 = pneg %p103
        $region18: #{_lambda_.1} parent=11 // pred_check_branch
          %181 = sbr.rel (%p179) target = $region20
        $region19: #{_lambda_.1} parent=11 // pred_region
          %p182 = scmp.lt.s32.totalorder %s22, 0
          %s183 = scalar_select %p182, %s22, 0
          %s184 = scalar_lea.vmem %s2, %s183
        $region20: #{_lambda_.1} parent=11 // pred_fallthru
          _
        // Predicated region
        $region21: #{_lambda_.1} parent=11 // pred_check
          %p185 = pneg %p129
        $region22: #{_lambda_.1} parent=11 // pred_check_branch
          %187 = sbr.rel (%p185) target = $region24
        $region23: #{_lambda_.1} parent=11 // pred_region
          %p188 = scmp.lt.s32.totalorder %s22, 0
          %s189 = scalar_select %p188, %s22, 0
          %s190 = scalar_lea.vmem %s3, %s189
        $region24: #{_lambda_.1} parent=11 // pred_fallthru
          _
      $region12: #{_lambda_.1} parent=5 // pred_fallthru
        _
      %p191 = scmp.lt.s32.totalorder %s13, 2
      // Predicated region
      $region25: #{_lambda_.1} parent=5 // pred_check
        %p192 = pneg %p191
      $region26: #{_lambda_.1} parent=5 // pred_check_branch
        %194 = sbr.rel (%p192) target = $region28
      $region27: #{_lambda_.1} parent=5 // pred_region
        // Predicated region
        $region29: #{_lambda_.1} parent=27 // pred_check
          %p195 = pneg %p45
        $region30: #{_lambda_.1} parent=27 // pred_check_branch
          %197 = sbr.rel (%p195) target = $region32
        $region31: #{_lambda_.1} parent=27 // pred_region
          %p198 = scmp.lt.s32.totalorder %s21, 1
          %s199 = scalar_select %p198, %s21, 1
          %s200 = smul.addr %s199, 20
          %s201 = smul.addr %s200, 4
          %s202 = scalar_lea.vmem %s0, %s201
        $region32: #{_lambda_.1} parent=27 // pred_fallthru
          _
      $region28: #{_lambda_.1} parent=5 // pred_fallthru
        _
      %p203 = scmp.le.s32.totalorder 1, %s13
      %p204 = scmp.lt.s32.totalorder %s13, 3
      %p205 = pnand %p203, %p204
      %p206 = pneg %p205
      // Predicated region
      $region33: #{_lambda_.1} parent=5 // pred_check
        _
      $region34: #{_lambda_.1} parent=5 // pred_check_branch
        %208 = sbr.rel (%p205) target = $region36
      $region35: #{_lambda_.1} parent=5 // pred_region
        %s209 = ssub.s32 %s13, 1
        %p210 = scmp.lt.s32.totalorder %s23, 1
        %s211 = scalar_select %p210, %s23, 1
        %s212 = smul.addr %s211, 20
        %s213 = smul.addr %s212, 4
        %s214 = scalar_lea.vmem %s0, %s213
        %p215 = pneg %p51
        %p216 = pneg %p48
        %p217 = scmp.lt.s32.totalorder %s22, 0
        %s218 = scalar_select %p217, %s22, 0
        %s219 = smul.addr %s218, 4
        %s220 = scalar_lea.vmem %s1, %s219
        %p221 = pneg %p77
        %p222 = pneg %p74
        %p223 = scmp.lt.s32.totalorder %s22, 0
        %s224 = scalar_select %p223, %s22, 0
        %s225 = scalar_lea.vmem %s2, %s224
        %p226 = pneg %p103
        %p227 = pneg %p100
        %p228 = scmp.lt.s32.totalorder %s22, 0
        %s229 = scalar_select %p228, %s22, 0
        %s230 = scalar_lea.vmem %s3, %s229
        %p231 = pneg %p129
        %p232 = pneg %p126
        %p233 = pneg %p157
        %p234 = pneg %p154
        %s235 = sand.u32 %s144, 1
        %s236 = scalar_lea.sflag [#allocation3], %s235
        %s237 = sand.u32 %s144, 1
        %s238 = smul.addr %s237, 80
        %s239 = scalar_lea.vmem [#allocation2], %s238
        %p240 = scmp.lt.s32.totalorder %s23, 1
        %s241 = scalar_select %p240, %s23, 1
        %s242 = smul.addr %s241, 20
        %s243 = smul.addr %s242, 4
        %s244 = scalar_lea.vmem %s0, %s243
        %p245 = scmp.lt.s32.totalorder %s22, 0
        %s246 = scalar_select %p245, %s22, 0
        %s247 = smul.addr %s246, 4
        %s248 = scalar_lea.vmem %s1, %s247
        %p249 = scmp.lt.s32.totalorder %s22, 0
        %s250 = scalar_select %p249, %s22, 0
        %s251 = scalar_lea.vmem %s2, %s250
        %p252 = scmp.lt.s32.totalorder %s22, 0
        %s253 = scalar_select %p252, %s22, 0
        %s254 = scalar_lea.vmem %s3, %s253
        %v256 = vld [vmem:[%s244] sm:$0xf]
        %v257 = vld [vmem:[%s244 + $0x4] sm:$0xf]
        %v258 = vld [vmem:[%s244 + $0x8] sm:$0xf]
        %v259 = vld [vmem:[%s244 + $0xc] sm:$0xf]
        %v260 = vld [vmem:[%s244 + $0x10] sm:$0xf]
        %v261 = vld [vmem:[%s244 + $0x14] sm:$0xf]
        %v262 = vld [vmem:[%s244 + $0x18] sm:$0xf]
        %v263 = vld [vmem:[%s244 + $0x1c] sm:$0xf]
        %v264 = vld [vmem:[%s244 + $0x20] sm:$0xf]
        %v265 = vld [vmem:[%s244 + $0x24] sm:$0xf]
        %v266 = vld [vmem:[%s244 + $0x28] sm:$0xf]
        %v267 = vld [vmem:[%s244 + $0x2c] sm:$0xf]
        %v268 = vld [vmem:[%s244 + $0x30] sm:$0xf]
        %v269 = vld [vmem:[%s244 + $0x34] sm:$0xf]
        %v270 = vld [vmem:[%s244 + $0x38] sm:$0xf]
        %v271 = vld [vmem:[%s244 + $0x3c] sm:$0xf]
        %v272 = vld [vmem:[%s244 + $0x40] sm:$0xf]
        %v273 = vld [vmem:[%s244 + $0x44] sm:$0xf]
        %v274 = vld [vmem:[%s244 + $0x48] sm:$0xf]
        %v275 = vld [vmem:[%s244 + $0x4c] sm:$0xf]
        %v276 = vld [vmem:[%s248] sm:$0xf]
        %v277 = vld [vmem:[%s248 + $0x4] sm:$0xf]
        %s278 = scalar_lea.vmem %s248, 24
        %v279 = vld [vmem:[%s278] sm:$0xf]
        %v280 = vld [vmem:[%s278 + $0x4] sm:$0xf]
        %v297 = vunpack.c.l.b16 %v258
        %v298 = vunpack.c.l.b16 %v259
        %v299 = vunpack.c.l.b16 %v260
        %v300 = vunpack.c.l.b16 %v261
        %v301 = vunpack.c.l.b16 %v262
        %v302 = vunpack.c.l.b16 %v263
        %v303 = vunpack.c.l.b16 %v264
        %v304 = vunpack.c.l.b16 %v265
        %v305 = vunpack.c.l.b16 %v266
        %v306 = vunpack.c.l.b16 %v267
        %v307 = vunpack.c.l.b16 %v268
        %v308 = vunpack.c.l.b16 %v269
        %v309 = vunpack.c.l.b16 %v270
        %v310 = vunpack.c.l.b16 %v271
        %v311 = vunpack.c.l.b16 %v272
        %v312 = vunpack.c.l.b16 %v273
        %v313 = vpack.c.b16 %v298, %v297
        %v314 = vpack.c.b16 %v300, %v299
        %v315 = vpack.c.b16 %v302, %v301
        %v316 = vpack.c.b16 %v304, %v303
        %v317 = vpack.c.b16 %v306, %v305
        %v318 = vpack.c.b16 %v308, %v307
        %v319 = vpack.c.b16 %v310, %v309
        %v320 = vpack.c.b16 %v312, %v311
        %v323 = vunpack.c.l.b16 %v279
        %v324 = vunpack.c.l.b16 %v280
        %v325 = vpack.c.b16 %v324, %v323
        %vm327 = vcmask 130048
        %v329 = vsel %vm327, %v313, 0
        %v332 = vsel %vm327, %v314, 0
        %v335 = vsel %vm327, %v315, 0
        %v338 = vsel %vm327, %v316, 0
        %v341 = vsel %vm327, %v317, 0
        %v344 = vsel %vm327, %v318, 0
        %v347 = vsel %vm327, %v319, 0
        %v350 = vsel %vm327, %v320, 0
        %352 = vmatprep.subr.bf16.mxu0 0
        %353 = vmatpush1.bf16.msra.mxu0 0
        %354 = vmatprep.subr.bf16.mxu0 0
        %355 = vmatpush1.bf16.msra.mxu0 0
        %356 = vmatprep.subr.bf16.mxu0 0
        %357 = vmatpush1.bf16.msra.mxu0 0
        %358 = vmatprep.subr.bf16.mxu0 0
        %359 = vmatpush1.bf16.msra.mxu0 0
        %360 = vmatprep.subr.bf16.mxu0 0
        %361 = vmatpush1.bf16.msra.mxu0 0
        %362 = vmatprep.subr.bf16.mxu0 0
        %363 = vmatpush1.bf16.msra.mxu0 0
        %364 = vmatprep.subr.bf16.mxu0 0
        %365 = vmatpush1.bf16.msra.mxu0 0
        %366 = vmatprep.subr.bf16.mxu0 0
        %367 = vmatpush1.bf16.msra.mxu0 %v325
        %368 = vmatprep.subr.bf16.mxu0 0
        %369 = vmatpush2.bf16.msra.mxu0 0
        %370 = vmatprep.subr.bf16.mxu0 0
        %371 = vmatpush2.bf16.msra.mxu0 0
        %372 = vmatprep.subr.bf16.mxu0 0
        %373 = vmatpush2.bf16.msra.mxu0 0
        %374 = vmatprep.subr.bf16.mxu0 0
        %375 = vmatpush2.bf16.msra.mxu0 0
        %376 = vmatprep.subr.bf16.mxu0 0
        %377 = vmatpush2.bf16.msra.mxu0 0
        %378 = vmatprep.subr.bf16.mxu0 0
        %379 = vmatpush2.bf16.msra.mxu0 0
        %380 = vmatprep.subr.bf16.mxu0 0
        %381 = vmatpush2.bf16.msra.mxu0 0
        %382 = vmatprep.subr.bf16.mxu0 0
        %383 = vmatpush2.bf16.msra.mxu0 0
        %384 = vmatprep.mubr.bf16.mxu0 0
        %385 = vmatmul.mubr.bf16.gmra.mxu0 %v329
        %v386 = vpop.f32.mrf.mxu0
        %v387 = vadd.f32 0.0, %v386
        %v388 = vpop.f32.mrf.mxu0
        %v389 = vpop.f32.mrf.mxu0
        %v390 = vadd.f32 0.0, %v389
        %v391 = vpop.f32.mrf.mxu0
        %392 = vmatprep.mubr.bf16.mxu0 0
        %393 = vmatmul.mubr.bf16.gmra.mxu0 %v332
        %v394 = vpop.f32.mrf.mxu0
        %v395 = vadd.f32 0.0, %v394
        %v396 = vpop.f32.mrf.mxu0
        %v397 = vpop.f32.mrf.mxu0
        %v398 = vadd.f32 0.0, %v397
        %v399 = vpop.f32.mrf.mxu0
        %400 = vmatprep.mubr.bf16.mxu0 0
        %401 = vmatmul.mubr.bf16.gmra.mxu0 %v335
        %v402 = vpop.f32.mrf.mxu0
        %v403 = vadd.f32 0.0, %v402
        %v404 = vpop.f32.mrf.mxu0
        %v405 = vpop.f32.mrf.mxu0
        %v406 = vadd.f32 0.0, %v405
        %v407 = vpop.f32.mrf.mxu0
        %408 = vmatprep.mubr.bf16.mxu0 0
        %409 = vmatmul.mubr.bf16.gmra.mxu0 %v338
        %v410 = vpop.f32.mrf.mxu0
        %v411 = vadd.f32 0.0, %v410
        %v412 = vpop.f32.mrf.mxu0
        %v413 = vpop.f32.mrf.mxu0
        %v414 = vadd.f32 0.0, %v413
        %v415 = vpop.f32.mrf.mxu0
        %416 = vmatprep.mubr.bf16.mxu0 0
        %417 = vmatmul.mubr.bf16.gmra.mxu0 %v341
        %v418 = vpop.f32.mrf.mxu0
        %v419 = vadd.f32 0.0, %v418
        %v420 = vpop.f32.mrf.mxu0
        %v421 = vpop.f32.mrf.mxu0
        %v422 = vadd.f32 0.0, %v421
        %v423 = vpop.f32.mrf.mxu0
        %424 = vmatprep.mubr.bf16.mxu0 0
        %425 = vmatmul.mubr.bf16.gmra.mxu0 %v344
        %v426 = vpop.f32.mrf.mxu0
        %v427 = vadd.f32 0.0, %v426
        %v428 = vpop.f32.mrf.mxu0
        %v429 = vpop.f32.mrf.mxu0
        %v430 = vadd.f32 0.0, %v429
        %v431 = vpop.f32.mrf.mxu0
        %432 = vmatprep.mubr.bf16.mxu0 0
        %433 = vmatmul.mubr.bf16.gmra.mxu0 %v347
        %v434 = vpop.f32.mrf.mxu0
        %v435 = vadd.f32 0.0, %v434
        %v436 = vpop.f32.mrf.mxu0
        %v437 = vpop.f32.mrf.mxu0
        %v438 = vadd.f32 0.0, %v437
        %v439 = vpop.f32.mrf.mxu0
        %440 = vmatprep.mubr.bf16.mxu0 0
        %441 = vmatmul.mubr.bf16.gmra.mxu0 %v350
        %v442 = vpop.f32.mrf.mxu0
        %v443 = vadd.f32 0.0, %v442
        %v444 = vpop.f32.mrf.mxu0
        %v445 = vpop.f32.mrf.mxu0
        %v446 = vadd.f32 0.0, %v445
        %v447 = vpop.f32.mrf.mxu0
        %448 = vdwg.mxu0
        %v451 = vunpack.c.l.b16 %v256
        %v452 = vunpack.c.l.b16 %v257
        %v453 = vpack.c.b16 %v452, %v451
        %v456 = vunpack.c.l.b16 %v276
        %v457 = vunpack.c.l.b16 %v277
        %v458 = vpack.c.b16 %v457, %v456
        %v461 = vsel %vm327, %v453, 0
        %463 = vmatprep.subr.bf16.mxu0 0
        %464 = vmatpush1.bf16.msra.mxu0 0
        %465 = vmatprep.subr.bf16.mxu0 0
        %466 = vmatpush1.bf16.msra.mxu0 0
        %467 = vmatprep.subr.bf16.mxu0 0
        %468 = vmatpush1.bf16.msra.mxu0 0
        %469 = vmatprep.subr.bf16.mxu0 0
        %470 = vmatpush1.bf16.msra.mxu0 0
        %471 = vmatprep.subr.bf16.mxu0 0
        %472 = vmatpush1.bf16.msra.mxu0 0
        %473 = vmatprep.subr.bf16.mxu0 0
        %474 = vmatpush1.bf16.msra.mxu0 0
        %475 = vmatprep.subr.bf16.mxu0 0
        %476 = vmatpush1.bf16.msra.mxu0 0
        %477 = vmatprep.subr.bf16.mxu0 0
        %478 = vmatpush1.bf16.msra.mxu0 %v458
        %479 = vmatprep.subr.bf16.mxu0 0
        %480 = vmatpush2.bf16.msra.mxu0 0
        %481 = vmatprep.subr.bf16.mxu0 0
        %482 = vmatpush2.bf16.msra.mxu0 0
        %483 = vmatprep.subr.bf16.mxu0 0
        %484 = vmatpush2.bf16.msra.mxu0 0
        %485 = vmatprep.subr.bf16.mxu0 0
        %486 = vmatpush2.bf16.msra.mxu0 0
        %487 = vmatprep.subr.bf16.mxu0 0
        %488 = vmatpush2.bf16.msra.mxu0 0
        %489 = vmatprep.subr.bf16.mxu0 0
        %490 = vmatpush2.bf16.msra.mxu0 0
        %491 = vmatprep.subr.bf16.mxu0 0
        %492 = vmatpush2.bf16.msra.mxu0 0
        %493 = vmatprep.subr.bf16.mxu0 0
        %494 = vmatpush2.bf16.msra.mxu0 0
        %495 = vmatprep.mubr.bf16.mxu0 0
        %496 = vmatmul.mubr.bf16.gmra.mxu0 %v461
        %v497 = vpop.f32.mrf.mxu0
        %v498 = vadd.f32 %v387, %v497
        %v499 = vpop.f32.mrf.mxu0
        %v500 = vpop.f32.mrf.mxu0
        %v501 = vadd.f32 %v390, %v500
        %v502 = vpop.f32.mrf.mxu0
        %503 = vmatprep.mubr.bf16.mxu0 0
        %504 = vmatmul.mubr.bf16.gmra.mxu0 %v329
        %v505 = vpop.f32.mrf.mxu0
        %v506 = vadd.f32 %v395, %v505
        %v507 = vpop.f32.mrf.mxu0
        %v508 = vpop.f32.mrf.mxu0
        %v509 = vadd.f32 %v398, %v508
        %v510 = vpop.f32.mrf.mxu0
        %511 = vmatprep.mubr.bf16.mxu0 0
        %512 = vmatmul.mubr.bf16.gmra.mxu0 %v332
        %v513 = vpop.f32.mrf.mxu0
        %v514 = vadd.f32 %v403, %v513
        %v515 = vpop.f32.mrf.mxu0
        %v516 = vpop.f32.mrf.mxu0
        %v517 = vadd.f32 %v406, %v516
        %v518 = vpop.f32.mrf.mxu0
        %519 = vmatprep.mubr.bf16.mxu0 0
        %520 = vmatmul.mubr.bf16.gmra.mxu0 %v335
        %v521 = vpop.f32.mrf.mxu0
        %v522 = vadd.f32 %v411, %v521
        %v523 = vpop.f32.mrf.mxu0
        %v524 = vpop.f32.mrf.mxu0
        %v525 = vadd.f32 %v414, %v524
        %v526 = vpop.f32.mrf.mxu0
        %527 = vmatprep.mubr.bf16.mxu0 0
        %528 = vmatmul.mubr.bf16.gmra.mxu0 %v338
        %v529 = vpop.f32.mrf.mxu0
        %v530 = vadd.f32 %v419, %v529
        %v531 = vpop.f32.mrf.mxu0
        %v532 = vpop.f32.mrf.mxu0
        %v533 = vadd.f32 %v422, %v532
        %v534 = vpop.f32.mrf.mxu0
        %535 = vmatprep.mubr.bf16.mxu0 0
        %536 = vmatmul.mubr.bf16.gmra.mxu0 %v341
        %v537 = vpop.f32.mrf.mxu0
        %v538 = vadd.f32 %v427, %v537
        %v539 = vpop.f32.mrf.mxu0
        %v540 = vpop.f32.mrf.mxu0
        %v541 = vadd.f32 %v430, %v540
        %v542 = vpop.f32.mrf.mxu0
        %543 = vmatprep.mubr.bf16.mxu0 0
        %544 = vmatmul.mubr.bf16.gmra.mxu0 %v344
        %v545 = vpop.f32.mrf.mxu0
        %v546 = vadd.f32 %v435, %v545
        %v547 = vpop.f32.mrf.mxu0
        %v548 = vpop.f32.mrf.mxu0
        %v549 = vadd.f32 %v438, %v548
        %v550 = vpop.f32.mrf.mxu0
        %551 = vmatprep.mubr.bf16.mxu0 0
        %552 = vmatmul.mubr.bf16.gmra.mxu0 %v347
        %v553 = vpop.f32.mrf.mxu0
        %v554 = vadd.f32 %v443, %v553
        %v555 = vpop.f32.mrf.mxu0
        %v556 = vpop.f32.mrf.mxu0
        %v557 = vadd.f32 %v446, %v556
        %v558 = vpop.f32.mrf.mxu0
        %559 = vdwg.mxu0
        %s560 = scalar_lea.vmem %s248, 48
        %v561 = vld [vmem:[%s560] sm:$0xf]
        %v562 = vld [vmem:[%s560 + $0x4] sm:$0xf]
        %v565 = vunpack.c.l.b16 %v274
        %v566 = vunpack.c.l.b16 %v275
        %v567 = vpack.c.b16 %v566, %v565
        %v570 = vunpack.c.l.b16 %v561
        %v571 = vunpack.c.l.b16 %v562
        %v572 = vpack.c.b16 %v571, %v570
        %v575 = vsel %vm327, %v567, 0
        %577 = vmatprep.subr.bf16.mxu0 0
        %578 = vmatpush1.bf16.msra.mxu0 0
        %579 = vmatprep.subr.bf16.mxu0 0
        %580 = vmatpush1.bf16.msra.mxu0 0
        %581 = vmatprep.subr.bf16.mxu0 0
        %582 = vmatpush1.bf16.msra.mxu0 0
        %583 = vmatprep.subr.bf16.mxu0 0
        %584 = vmatpush1.bf16.msra.mxu0 0
        %585 = vmatprep.subr.bf16.mxu0 0
        %586 = vmatpush1.bf16.msra.mxu0 0
        %587 = vmatprep.subr.bf16.mxu0 0
        %588 = vmatpush1.bf16.msra.mxu0 0
        %589 = vmatprep.subr.bf16.mxu0 0
        %590 = vmatpush1.bf16.msra.mxu0 0
        %591 = vmatprep.subr.bf16.mxu0 0
        %592 = vmatpush1.bf16.msra.mxu0 %v572
        %593 = vmatprep.subr.bf16.mxu0 0
        %594 = vmatpush2.bf16.msra.mxu0 0
        %595 = vmatprep.subr.bf16.mxu0 0
        %596 = vmatpush2.bf16.msra.mxu0 0
        %597 = vmatprep.subr.bf16.mxu0 0
        %598 = vmatpush2.bf16.msra.mxu0 0
        %599 = vmatprep.subr.bf16.mxu0 0
        %600 = vmatpush2.bf16.msra.mxu0 0
        %601 = vmatprep.subr.bf16.mxu0 0
        %602 = vmatpush2.bf16.msra.mxu0 0
        %603 = vmatprep.subr.bf16.mxu0 0
        %604 = vmatpush2.bf16.msra.mxu0 0
        %605 = vmatprep.subr.bf16.mxu0 0
        %606 = vmatpush2.bf16.msra.mxu0 0
        %607 = vmatprep.subr.bf16.mxu0 0
        %608 = vmatpush2.bf16.msra.mxu0 0
        %609 = vmatprep.mubr.bf16.mxu0 0
        %610 = vmatmul.mubr.bf16.gmra.mxu0 %v332
        %v611 = vpop.f32.mrf.mxu0
        %v612 = vadd.f32 0.0, %v611
        %v613 = vpop.f32.mrf.mxu0
        %v614 = vpop.f32.mrf.mxu0
        %v615 = vadd.f32 0.0, %v614
        %v616 = vpop.f32.mrf.mxu0
        %617 = vmatprep.mubr.bf16.mxu0 0
        %618 = vmatmul.mubr.bf16.gmra.mxu0 %v335
        %v619 = vpop.f32.mrf.mxu0
        %v620 = vadd.f32 0.0, %v619
        %v621 = vpop.f32.mrf.mxu0
        %v622 = vpop.f32.mrf.mxu0
        %v623 = vadd.f32 0.0, %v622
        %v624 = vpop.f32.mrf.mxu0
        %625 = vmatprep.mubr.bf16.mxu0 0
        %626 = vmatmul.mubr.bf16.gmra.mxu0 %v338
        %v627 = vpop.f32.mrf.mxu0
        %v628 = vadd.f32 0.0, %v627
        %v629 = vpop.f32.mrf.mxu0
        %v630 = vpop.f32.mrf.mxu0
        %v631 = vadd.f32 0.0, %v630
        %v632 = vpop.f32.mrf.mxu0
        %633 = vmatprep.mubr.bf16.mxu0 0
        %634 = vmatmul.mubr.bf16.gmra.mxu0 %v341
        %v635 = vpop.f32.mrf.mxu0
        %v636 = vadd.f32 0.0, %v635
        %v637 = vpop.f32.mrf.mxu0
        %v638 = vpop.f32.mrf.mxu0
        %v639 = vadd.f32 0.0, %v638
        %v640 = vpop.f32.mrf.mxu0
        %641 = vmatprep.mubr.bf16.mxu0 0
        %642 = vmatmul.mubr.bf16.gmra.mxu0 %v344
        %v643 = vpop.f32.mrf.mxu0
        %v644 = vadd.f32 0.0, %v643
        %v645 = vpop.f32.mrf.mxu0
        %v646 = vpop.f32.mrf.mxu0
        %v647 = vadd.f32 0.0, %v646
        %v648 = vpop.f32.mrf.mxu0
        %649 = vmatprep.mubr.bf16.mxu0 0
        %650 = vmatmul.mubr.bf16.gmra.mxu0 %v347
        %v651 = vpop.f32.mrf.mxu0
        %v652 = vadd.f32 0.0, %v651
        %v653 = vpop.f32.mrf.mxu0
        %v654 = vpop.f32.mrf.mxu0
        %v655 = vadd.f32 0.0, %v654
        %v656 = vpop.f32.mrf.mxu0
        %657 = vmatprep.mubr.bf16.mxu0 0
        %658 = vmatmul.mubr.bf16.gmra.mxu0 %v350
        %v659 = vpop.f32.mrf.mxu0
        %v660 = vadd.f32 0.0, %v659
        %v661 = vpop.f32.mrf.mxu0
        %v662 = vpop.f32.mrf.mxu0
        %v663 = vadd.f32 0.0, %v662
        %v664 = vpop.f32.mrf.mxu0
        %665 = vmatprep.mubr.bf16.mxu0 0
        %666 = vmatmul.mubr.bf16.gmra.mxu0 %v575
        %v667 = vpop.f32.mrf.mxu0
        %v668 = vadd.f32 0.0, %v667
        %v669 = vpop.f32.mrf.mxu0
        %v670 = vpop.f32.mrf.mxu0
        %v671 = vadd.f32 0.0, %v670
        %v672 = vpop.f32.mrf.mxu0
        %673 = vdwg.mxu0
        %v674 = vadd.f32 %v498, %v612
        %v675 = vadd.f32 %v501, %v615
        %v676 = vadd.f32 %v506, %v620
        %v677 = vadd.f32 %v509, %v623
        %v678 = vadd.f32 %v514, %v628
        %v679 = vadd.f32 %v517, %v631
        %v680 = vadd.f32 %v522, %v636
        %v681 = vadd.f32 %v525, %v639
        %v682 = vadd.f32 %v530, %v644
        %v683 = vadd.f32 %v533, %v647
        %v684 = vadd.f32 %v538, %v652
        %v685 = vadd.f32 %v541, %v655
        %v686 = vadd.f32 %v546, %v660
        %v687 = vadd.f32 %v549, %v663
        %v688 = vadd.f32 %v554, %v668
        %v689 = vadd.f32 %v557, %v671
        %s690 = scalar_lea.vmem %s248, 8
        %v691 = vld [vmem:[%s690] sm:$0xf]
        %v692 = vld [vmem:[%s690 + $0x4] sm:$0xf]
        %s693 = scalar_lea.vmem %s248, 32
        %v694 = vld [vmem:[%s693] sm:$0xf]
        %v695 = vld [vmem:[%s693 + $0x4] sm:$0xf]
        %v698 = vunpack.c.l.b16 %v694
        %v699 = vunpack.c.l.b16 %v695
        %v700 = vpack.c.b16 %v699, %v698
        %702 = vmatprep.subr.bf16.mxu0 0
        %703 = vmatpush1.bf16.msra.mxu0 0
        %704 = vmatprep.subr.bf16.mxu0 0
        %705 = vmatpush1.bf16.msra.mxu0 0
        %706 = vmatprep.subr.bf16.mxu0 0
        %707 = vmatpush1.bf16.msra.mxu0 0
        %708 = vmatprep.subr.bf16.mxu0 0
        %709 = vmatpush1.bf16.msra.mxu0 0
        %710 = vmatprep.subr.bf16.mxu0 0
        %711 = vmatpush1.bf16.msra.mxu0 0
        %712 = vmatprep.subr.bf16.mxu0 0
        %713 = vmatpush1.bf16.msra.mxu0 0
        %714 = vmatprep.subr.bf16.mxu0 0
        %715 = vmatpush1.bf16.msra.mxu0 0
        %716 = vmatprep.subr.bf16.mxu0 0
        %717 = vmatpush1.bf16.msra.mxu0 %v700
        %718 = vmatprep.subr.bf16.mxu0 0
        %719 = vmatpush2.bf16.msra.mxu0 0
        %720 = vmatprep.subr.bf16.mxu0 0
        %721 = vmatpush2.bf16.msra.mxu0 0
        %722 = vmatprep.subr.bf16.mxu0 0
        %723 = vmatpush2.bf16.msra.mxu0 0
        %724 = vmatprep.subr.bf16.mxu0 0
        %725 = vmatpush2.bf16.msra.mxu0 0
        %726 = vmatprep.subr.bf16.mxu0 0
        %727 = vmatpush2.bf16.msra.mxu0 0
        %728 = vmatprep.subr.bf16.mxu0 0
        %729 = vmatpush2.bf16.msra.mxu0 0
        %730 = vmatprep.subr.bf16.mxu0 0
        %731 = vmatpush2.bf16.msra.mxu0 0
        %732 = vmatprep.subr.bf16.mxu0 0
        %733 = vmatpush2.bf16.msra.mxu0 0
        %734 = vmatprep.mubr.bf16.mxu0 0
        %735 = vmatmul.mubr.bf16.gmra.mxu0 %v329
        %v736 = vpop.f32.mrf.mxu0
        %v737 = vadd.f32 0.0, %v736
        %v738 = vpop.f32.mrf.mxu0
        %v739 = vpop.f32.mrf.mxu0
        %v740 = vadd.f32 0.0, %v739
        %v741 = vpop.f32.mrf.mxu0
        %742 = vmatprep.mubr.bf16.mxu0 0
        %743 = vmatmul.mubr.bf16.gmra.mxu0 %v332
        %v744 = vpop.f32.mrf.mxu0
        %v745 = vadd.f32 0.0, %v744
        %v746 = vpop.f32.mrf.mxu0
        %v747 = vpop.f32.mrf.mxu0
        %v748 = vadd.f32 0.0, %v747
        %v749 = vpop.f32.mrf.mxu0
        %750 = vmatprep.mubr.bf16.mxu0 0
        %751 = vmatmul.mubr.bf16.gmra.mxu0 %v335
        %v752 = vpop.f32.mrf.mxu0
        %v753 = vadd.f32 0.0, %v752
        %v754 = vpop.f32.mrf.mxu0
        %v755 = vpop.f32.mrf.mxu0
        %v756 = vadd.f32 0.0, %v755
        %v757 = vpop.f32.mrf.mxu0
        %758 = vmatprep.mubr.bf16.mxu0 0
        %759 = vmatmul.mubr.bf16.gmra.mxu0 %v338
        %v760 = vpop.f32.mrf.mxu0
        %v761 = vadd.f32 0.0, %v760
        %v762 = vpop.f32.mrf.mxu0
        %v763 = vpop.f32.mrf.mxu0
        %v764 = vadd.f32 0.0, %v763
        %v765 = vpop.f32.mrf.mxu0
        %766 = vmatprep.mubr.bf16.mxu0 0
        %767 = vmatmul.mubr.bf16.gmra.mxu0 %v341
        %v768 = vpop.f32.mrf.mxu0
        %v769 = vadd.f32 0.0, %v768
        %v770 = vpop.f32.mrf.mxu0
        %v771 = vpop.f32.mrf.mxu0
        %v772 = vadd.f32 0.0, %v771
        %v773 = vpop.f32.mrf.mxu0
        %774 = vmatprep.mubr.bf16.mxu0 0
        %775 = vmatmul.mubr.bf16.gmra.mxu0 %v344
        %v776 = vpop.f32.mrf.mxu0
        %v777 = vadd.f32 0.0, %v776
        %v778 = vpop.f32.mrf.mxu0
        %v779 = vpop.f32.mrf.mxu0
        %v780 = vadd.f32 0.0, %v779
        %v781 = vpop.f32.mrf.mxu0
        %782 = vmatprep.mubr.bf16.mxu0 0
        %783 = vmatmul.mubr.bf16.gmra.mxu0 %v347
        %v784 = vpop.f32.mrf.mxu0
        %v785 = vadd.f32 0.0, %v784
        %v786 = vpop.f32.mrf.mxu0
        %v787 = vpop.f32.mrf.mxu0
        %v788 = vadd.f32 0.0, %v787
        %v789 = vpop.f32.mrf.mxu0
        %790 = vmatprep.mubr.bf16.mxu0 0
        %791 = vmatmul.mubr.bf16.gmra.mxu0 %v350
        %v792 = vpop.f32.mrf.mxu0
        %v793 = vadd.f32 0.0, %v792
        %v794 = vpop.f32.mrf.mxu0
        %v795 = vpop.f32.mrf.mxu0
        %v796 = vadd.f32 0.0, %v795
        %v797 = vpop.f32.mrf.mxu0
        %798 = vdwg.mxu0
        %v801 = vunpack.c.l.b16 %v691
        %v802 = vunpack.c.l.b16 %v692
        %v803 = vpack.c.b16 %v802, %v801
        %805 = vmatprep.subr.bf16.mxu0 0
        %806 = vmatpush1.bf16.msra.mxu0 0
        %807 = vmatprep.subr.bf16.mxu0 0
        %808 = vmatpush1.bf16.msra.mxu0 0
        %809 = vmatprep.subr.bf16.mxu0 0
        %810 = vmatpush1.bf16.msra.mxu0 0
        %811 = vmatprep.subr.bf16.mxu0 0
        %812 = vmatpush1.bf16.msra.mxu0 0
        %813 = vmatprep.subr.bf16.mxu0 0
        %814 = vmatpush1.bf16.msra.mxu0 0
        %815 = vmatprep.subr.bf16.mxu0 0
        %816 = vmatpush1.bf16.msra.mxu0 0
        %817 = vmatprep.subr.bf16.mxu0 0
        %818 = vmatpush1.bf16.msra.mxu0 0
        %819 = vmatprep.subr.bf16.mxu0 0
        %820 = vmatpush1.bf16.msra.mxu0 %v803
        %821 = vmatprep.subr.bf16.mxu0 0
        %822 = vmatpush2.bf16.msra.mxu0 0
        %823 = vmatprep.subr.bf16.mxu0 0
        %824 = vmatpush2.bf16.msra.mxu0 0
        %825 = vmatprep.subr.bf16.mxu0 0
        %826 = vmatpush2.bf16.msra.mxu0 0
        %827 = vmatprep.subr.bf16.mxu0 0
        %828 = vmatpush2.bf16.msra.mxu0 0
        %829 = vmatprep.subr.bf16.mxu0 0
        %830 = vmatpush2.bf16.msra.mxu0 0
        %831 = vmatprep.subr.bf16.mxu0 0
        %832 = vmatpush2.bf16.msra.mxu0 0
        %833 = vmatprep.subr.bf16.mxu0 0
        %834 = vmatpush2.bf16.msra.mxu0 0
        %835 = vmatprep.subr.bf16.mxu0 0
        %836 = vmatpush2.bf16.msra.mxu0 0
        %837 = vmatprep.mubr.bf16.mxu0 0
        %838 = vmatmul.mubr.bf16.gmra.mxu0 %v461
        %v839 = vpop.f32.mrf.mxu0
        %v840 = vadd.f32 %v737, %v839
        %v841 = vpop.f32.mrf.mxu0
        %v842 = vpop.f32.mrf.mxu0
        %v843 = vadd.f32 %v740, %v842
        %v844 = vpop.f32.mrf.mxu0
        %845 = vmatprep.mubr.bf16.mxu0 0
        %846 = vmatmul.mubr.bf16.gmra.mxu0 %v329
        %v847 = vpop.f32.mrf.mxu0
        %v848 = vadd.f32 %v745, %v847
        %v849 = vpop.f32.mrf.mxu0
        %v850 = vpop.f32.mrf.mxu0
        %v851 = vadd.f32 %v748, %v850
        %v852 = vpop.f32.mrf.mxu0
        %853 = vmatprep.mubr.bf16.mxu0 0
        %854 = vmatmul.mubr.bf16.gmra.mxu0 %v332
        %v855 = vpop.f32.mrf.mxu0
        %v856 = vadd.f32 %v753, %v855
        %v857 = vpop.f32.mrf.mxu0
        %v858 = vpop.f32.mrf.mxu0
        %v859 = vadd.f32 %v756, %v858
        %v860 = vpop.f32.mrf.mxu0
        %861 = vmatprep.mubr.bf16.mxu0 0
        %862 = vmatmul.mubr.bf16.gmra.mxu0 %v335
        %v863 = vpop.f32.mrf.mxu0
        %v864 = vadd.f32 %v761, %v863
        %v865 = vpop.f32.mrf.mxu0
        %v866 = vpop.f32.mrf.mxu0
        %v867 = vadd.f32 %v764, %v866
        %v868 = vpop.f32.mrf.mxu0
        %869 = vmatprep.mubr.bf16.mxu0 0
        %870 = vmatmul.mubr.bf16.gmra.mxu0 %v338
        %v871 = vpop.f32.mrf.mxu0
        %v872 = vadd.f32 %v769, %v871
        %v873 = vpop.f32.mrf.mxu0
        %v874 = vpop.f32.mrf.mxu0
        %v875 = vadd.f32 %v772, %v874
        %v876 = vpop.f32.mrf.mxu0
        %877 = vmatprep.mubr.bf16.mxu0 0
        %878 = vmatmul.mubr.bf16.gmra.mxu0 %v341
        %v879 = vpop.f32.mrf.mxu0
        %v880 = vadd.f32 %v777, %v879
        %v881 = vpop.f32.mrf.mxu0
        %v882 = vpop.f32.mrf.mxu0
        %v883 = vadd.f32 %v780, %v882
        %v884 = vpop.f32.mrf.mxu0
        %885 = vmatprep.mubr.bf16.mxu0 0
        %886 = vmatmul.mubr.bf16.gmra.mxu0 %v344
        %v887 = vpop.f32.mrf.mxu0
        %v888 = vadd.f32 %v785, %v887
        %v889 = vpop.f32.mrf.mxu0
        %v890 = vpop.f32.mrf.mxu0
        %v891 = vadd.f32 %v788, %v890
        %v892 = vpop.f32.mrf.mxu0
        %893 = vmatprep.mubr.bf16.mxu0 0
        %894 = vmatmul.mubr.bf16.gmra.mxu0 %v347
        %v895 = vpop.f32.mrf.mxu0
        %v896 = vadd.f32 %v793, %v895
        %v897 = vpop.f32.mrf.mxu0
        %v898 = vpop.f32.mrf.mxu0
        %v899 = vadd.f32 %v796, %v898
        %v900 = vpop.f32.mrf.mxu0
        %901 = vdwg.mxu0
        %s902 = scalar_lea.vmem %s248, 56
        %v903 = vld [vmem:[%s902] sm:$0xf]
        %v904 = vld [vmem:[%s902 + $0x4] sm:$0xf]
        %v907 = vunpack.c.l.b16 %v903
        %v908 = vunpack.c.l.b16 %v904
        %v909 = vpack.c.b16 %v908, %v907
        %911 = vmatprep.subr.bf16.mxu0 0
        %912 = vmatpush1.bf16.msra.mxu0 0
        %913 = vmatprep.subr.bf16.mxu0 0
        %914 = vmatpush1.bf16.msra.mxu0 0
        %915 = vmatprep.subr.bf16.mxu0 0
        %916 = vmatpush1.bf16.msra.mxu0 0
        %917 = vmatprep.subr.bf16.mxu0 0
        %918 = vmatpush1.bf16.msra.mxu0 0
        %919 = vmatprep.subr.bf16.mxu0 0
        %920 = vmatpush1.bf16.msra.mxu0 0
        %921 = vmatprep.subr.bf16.mxu0 0
        %922 = vmatpush1.bf16.msra.mxu0 0
        %923 = vmatprep.subr.bf16.mxu0 0
        %924 = vmatpush1.bf16.msra.mxu0 0
        %925 = vmatprep.subr.bf16.mxu0 0
        %926 = vmatpush1.bf16.msra.mxu0 %v909
        %927 = vmatprep.subr.bf16.mxu0 0
        %928 = vmatpush2.bf16.msra.mxu0 0
        %929 = vmatprep.subr.bf16.mxu0 0
        %930 = vmatpush2.bf16.msra.mxu0 0
        %931 = vmatprep.subr.bf16.mxu0 0
        %932 = vmatpush2.bf16.msra.mxu0 0
        %933 = vmatprep.subr.bf16.mxu0 0
        %934 = vmatpush2.bf16.msra.mxu0 0
        %935 = vmatprep.subr.bf16.mxu0 0
        %936 = vmatpush2.bf16.msra.mxu0 0
        %937 = vmatprep.subr.bf16.mxu0 0
        %938 = vmatpush2.bf16.msra.mxu0 0
        %939 = vmatprep.subr.bf16.mxu0 0
        %940 = vmatpush2.bf16.msra.mxu0 0
        %941 = vmatprep.subr.bf16.mxu0 0
        %942 = vmatpush2.bf16.msra.mxu0 0
        %943 = vmatprep.mubr.bf16.mxu0 0
        %944 = vmatmul.mubr.bf16.gmra.mxu0 %v332
        %v945 = vpop.f32.mrf.mxu0
        %v946 = vadd.f32 0.0, %v945
        %v947 = vpop.f32.mrf.mxu0
        %v948 = vpop.f32.mrf.mxu0
        %v949 = vadd.f32 0.0, %v948
        %v950 = vpop.f32.mrf.mxu0
        %951 = vmatprep.mubr.bf16.mxu0 0
        %952 = vmatmul.mubr.bf16.gmra.mxu0 %v335
        %v953 = vpop.f32.mrf.mxu0
        %v954 = vadd.f32 0.0, %v953
        %v955 = vpop.f32.mrf.mxu0
        %v956 = vpop.f32.mrf.mxu0
        %v957 = vadd.f32 0.0, %v956
        %v958 = vpop.f32.mrf.mxu0
        %959 = vmatprep.mubr.bf16.mxu0 0
        %960 = vmatmul.mubr.bf16.gmra.mxu0 %v338
        %v961 = vpop.f32.mrf.mxu0
        %v962 = vadd.f32 0.0, %v961
        %v963 = vpop.f32.mrf.mxu0
        %v964 = vpop.f32.mrf.mxu0
        %v965 = vadd.f32 0.0, %v964
        %v966 = vpop.f32.mrf.mxu0
        %967 = vmatprep.mubr.bf16.mxu0 0
        %968 = vmatmul.mubr.bf16.gmra.mxu0 %v341
        %v969 = vpop.f32.mrf.mxu0
        %v970 = vadd.f32 0.0, %v969
        %v971 = vpop.f32.mrf.mxu0
        %v972 = vpop.f32.mrf.mxu0
        %v973 = vadd.f32 0.0, %v972
        %v974 = vpop.f32.mrf.mxu0
        %975 = vmatprep.mubr.bf16.mxu0 0
        %976 = vmatmul.mubr.bf16.gmra.mxu0 %v344
        %v977 = vpop.f32.mrf.mxu0
        %v978 = vadd.f32 0.0, %v977
        %v979 = vpop.f32.mrf.mxu0
        %v980 = vpop.f32.mrf.mxu0
        %v981 = vadd.f32 0.0, %v980
        %v982 = vpop.f32.mrf.mxu0
        %983 = vmatprep.mubr.bf16.mxu0 0
        %984 = vmatmul.mubr.bf16.gmra.mxu0 %v347
        %v985 = vpop.f32.mrf.mxu0
        %v986 = vadd.f32 0.0, %v985
        %v987 = vpop.f32.mrf.mxu0
        %v988 = vpop.f32.mrf.mxu0
        %v989 = vadd.f32 0.0, %v988
        %v990 = vpop.f32.mrf.mxu0
        %991 = vmatprep.mubr.bf16.mxu0 0
        %992 = vmatmul.mubr.bf16.gmra.mxu0 %v350
        %v993 = vpop.f32.mrf.mxu0
        %v994 = vadd.f32 0.0, %v993
        %v995 = vpop.f32.mrf.mxu0
        %v996 = vpop.f32.mrf.mxu0
        %v997 = vadd.f32 0.0, %v996
        %v998 = vpop.f32.mrf.mxu0
        %999 = vmatprep.mubr.bf16.mxu0 0
        %1000 = vmatmul.mubr.bf16.gmra.mxu0 %v575
        %v1001 = vpop.f32.mrf.mxu0
        %v1002 = vadd.f32 0.0, %v1001
        %v1003 = vpop.f32.mrf.mxu0
        %v1004 = vpop.f32.mrf.mxu0
        %v1005 = vadd.f32 0.0, %v1004
        %v1006 = vpop.f32.mrf.mxu0
        %1007 = vdwg.mxu0
        %v1008 = vadd.f32 %v840, %v946
        %v1009 = vadd.f32 %v843, %v949
        %v1010 = vadd.f32 %v848, %v954
        %v1011 = vadd.f32 %v851, %v957
        %v1012 = vadd.f32 %v856, %v962
        %v1013 = vadd.f32 %v859, %v965
        %v1014 = vadd.f32 %v864, %v970
        %v1015 = vadd.f32 %v867, %v973
        %v1016 = vadd.f32 %v872, %v978
        %v1017 = vadd.f32 %v875, %v981
        %v1018 = vadd.f32 %v880, %v986
        %v1019 = vadd.f32 %v883, %v989
        %v1020 = vadd.f32 %v888, %v994
        %v1021 = vadd.f32 %v891, %v997
        %v1022 = vadd.f32 %v896, %v1002
        %v1023 = vadd.f32 %v899, %v1005
        %s1024 = scalar_lea.vmem %s248, 16
        %v1025 = vld [vmem:[%s1024] sm:$0xf]
        %v1026 = vld [vmem:[%s1024 + $0x4] sm:$0xf]
        %s1027 = scalar_lea.vmem %s248, 40
        %v1028 = vld [vmem:[%s1027] sm:$0xf]
        %v1029 = vld [vmem:[%s1027 + $0x4] sm:$0xf]
        %v1032 = vunpack.c.l.b16 %v1028
        %v1033 = vunpack.c.l.b16 %v1029
        %v1034 = vpack.c.b16 %v1033, %v1032
        %1036 = vmatprep.subr.bf16.mxu0 0
        %1037 = vmatpush1.bf16.msra.mxu0 0
        %1038 = vmatprep.subr.bf16.mxu0 0
        %1039 = vmatpush1.bf16.msra.mxu0 0
        %1040 = vmatprep.subr.bf16.mxu0 0
        %1041 = vmatpush1.bf16.msra.mxu0 0
        %1042 = vmatprep.subr.bf16.mxu0 0
        %1043 = vmatpush1.bf16.msra.mxu0 0
        %1044 = vmatprep.subr.bf16.mxu0 0
        %1045 = vmatpush1.bf16.msra.mxu0 0
        %1046 = vmatprep.subr.bf16.mxu0 0
        %1047 = vmatpush1.bf16.msra.mxu0 0
        %1048 = vmatprep.subr.bf16.mxu0 0
        %1049 = vmatpush1.bf16.msra.mxu0 0
        %1050 = vmatprep.subr.bf16.mxu0 0
        %1051 = vmatpush1.bf16.msra.mxu0 %v1034
        %1052 = vmatprep.subr.bf16.mxu0 0
        %1053 = vmatpush2.bf16.msra.mxu0 0
        %1054 = vmatprep.subr.bf16.mxu0 0
        %1055 = vmatpush2.bf16.msra.mxu0 0
        %1056 = vmatprep.subr.bf16.mxu0 0
        %1057 = vmatpush2.bf16.msra.mxu0 0
        %1058 = vmatprep.subr.bf16.mxu0 0
        %1059 = vmatpush2.bf16.msra.mxu0 0
        %1060 = vmatprep.subr.bf16.mxu0 0
        %1061 = vmatpush2.bf16.msra.mxu0 0
        %1062 = vmatprep.subr.bf16.mxu0 0
        %1063 = vmatpush2.bf16.msra.mxu0 0
        %1064 = vmatprep.subr.bf16.mxu0 0
        %1065 = vmatpush2.bf16.msra.mxu0 0
        %1066 = vmatprep.subr.bf16.mxu0 0
        %1067 = vmatpush2.bf16.msra.mxu0 0
        %1068 = vmatprep.mubr.bf16.mxu0 0
        %1069 = vmatmul.mubr.bf16.gmra.mxu0 %v329
        %v1070 = vpop.f32.mrf.mxu0
        %v1071 = vadd.f32 0.0, %v1070
        %v1072 = vpop.f32.mrf.mxu0
        %v1073 = vpop.f32.mrf.mxu0
        %v1074 = vadd.f32 0.0, %v1073
        %v1075 = vpop.f32.mrf.mxu0
        %1076 = vmatprep.mubr.bf16.mxu0 0
        %1077 = vmatmul.mubr.bf16.gmra.mxu0 %v332
        %v1078 = vpop.f32.mrf.mxu0
        %v1079 = vadd.f32 0.0, %v1078
        %v1080 = vpop.f32.mrf.mxu0
        %v1081 = vpop.f32.mrf.mxu0
        %v1082 = vadd.f32 0.0, %v1081
        %v1083 = vpop.f32.mrf.mxu0
        %1084 = vmatprep.mubr.bf16.mxu0 0
        %1085 = vmatmul.mubr.bf16.gmra.mxu0 %v335
        %v1086 = vpop.f32.mrf.mxu0
        %v1087 = vadd.f32 0.0, %v1086
        %v1088 = vpop.f32.mrf.mxu0
        %v1089 = vpop.f32.mrf.mxu0
        %v1090 = vadd.f32 0.0, %v1089
        %v1091 = vpop.f32.mrf.mxu0
        %1092 = vmatprep.mubr.bf16.mxu0 0
        %1093 = vmatmul.mubr.bf16.gmra.mxu0 %v338
        %v1094 = vpop.f32.mrf.mxu0
        %v1095 = vadd.f32 0.0, %v1094
        %v1096 = vpop.f32.mrf.mxu0
        %v1097 = vpop.f32.mrf.mxu0
        %v1098 = vadd.f32 0.0, %v1097
        %v1099 = vpop.f32.mrf.mxu0
        %1100 = vmatprep.mubr.bf16.mxu0 0
        %1101 = vmatmul.mubr.bf16.gmra.mxu0 %v341
        %v1102 = vpop.f32.mrf.mxu0
        %v1103 = vadd.f32 0.0, %v1102
        %v1104 = vpop.f32.mrf.mxu0
        %v1105 = vpop.f32.mrf.mxu0
        %v1106 = vadd.f32 0.0, %v1105
        %v1107 = vpop.f32.mrf.mxu0
        %1108 = vmatprep.mubr.bf16.mxu0 0
        %1109 = vmatmul.mubr.bf16.gmra.mxu0 %v344
        %v1110 = vpop.f32.mrf.mxu0
        %v1111 = vadd.f32 0.0, %v1110
        %v1112 = vpop.f32.mrf.mxu0
        %v1113 = vpop.f32.mrf.mxu0
        %v1114 = vadd.f32 0.0, %v1113
        %v1115 = vpop.f32.mrf.mxu0
        %1116 = vmatprep.mubr.bf16.mxu0 0
        %1117 = vmatmul.mubr.bf16.gmra.mxu0 %v347
        %v1118 = vpop.f32.mrf.mxu0
        %v1119 = vadd.f32 0.0, %v1118
        %v1120 = vpop.f32.mrf.mxu0
        %v1121 = vpop.f32.mrf.mxu0
        %v1122 = vadd.f32 0.0, %v1121
        %v1123 = vpop.f32.mrf.mxu0
        %1124 = vmatprep.mubr.bf16.mxu0 0
        %1125 = vmatmul.mubr.bf16.gmra.mxu0 %v350
        %v1126 = vpop.f32.mrf.mxu0
        %v1127 = vadd.f32 0.0, %v1126
        %v1128 = vpop.f32.mrf.mxu0
        %v1129 = vpop.f32.mrf.mxu0
        %v1130 = vadd.f32 0.0, %v1129
        %v1131 = vpop.f32.mrf.mxu0
        %1132 = vdwg.mxu0
        %v1135 = vunpack.c.l.b16 %v1025
        %v1136 = vunpack.c.l.b16 %v1026
        %v1137 = vpack.c.b16 %v1136, %v1135
        %1139 = vmatprep.subr.bf16.mxu0 0
        %1140 = vmatpush1.bf16.msra.mxu0 0
        %1141 = vmatprep.subr.bf16.mxu0 0
        %1142 = vmatpush1.bf16.msra.mxu0 0
        %1143 = vmatprep.subr.bf16.mxu0 0
        %1144 = vmatpush1.bf16.msra.mxu0 0
        %1145 = vmatprep.subr.bf16.mxu0 0
        %1146 = vmatpush1.bf16.msra.mxu0 0
        %1147 = vmatprep.subr.bf16.mxu0 0
        %1148 = vmatpush1.bf16.msra.mxu0 0
        %1149 = vmatprep.subr.bf16.mxu0 0
        %1150 = vmatpush1.bf16.msra.mxu0 0
        %1151 = vmatprep.subr.bf16.mxu0 0
        %1152 = vmatpush1.bf16.msra.mxu0 0
        %1153 = vmatprep.subr.bf16.mxu0 0
        %1154 = vmatpush1.bf16.msra.mxu0 %v1137
        %1155 = vmatprep.subr.bf16.mxu0 0
        %1156 = vmatpush2.bf16.msra.mxu0 0
        %1157 = vmatprep.subr.bf16.mxu0 0
        %1158 = vmatpush2.bf16.msra.mxu0 0
        %1159 = vmatprep.subr.bf16.mxu0 0
        %1160 = vmatpush2.bf16.msra.mxu0 0
        %1161 = vmatprep.subr.bf16.mxu0 0
        %1162 = vmatpush2.bf16.msra.mxu0 0
        %1163 = vmatprep.subr.bf16.mxu0 0
        %1164 = vmatpush2.bf16.msra.mxu0 0
        %1165 = vmatprep.subr.bf16.mxu0 0
        %1166 = vmatpush2.bf16.msra.mxu0 0
        %1167 = vmatprep.subr.bf16.mxu0 0
        %1168 = vmatpush2.bf16.msra.mxu0 0
        %1169 = vmatprep.subr.bf16.mxu0 0
        %1170 = vmatpush2.bf16.msra.mxu0 0
        %1171 = vmatprep.mubr.bf16.mxu0 0
        %1172 = vmatmul.mubr.bf16.gmra.mxu0 %v461
        %v1173 = vpop.f32.mrf.mxu0
        %v1174 = vadd.f32 %v1071, %v1173
        %v1175 = vpop.f32.mrf.mxu0
        %v1176 = vpop.f32.mrf.mxu0
        %v1177 = vadd.f32 %v1074, %v1176
        %v1178 = vpop.f32.mrf.mxu0
        %1179 = vmatprep.mubr.bf16.mxu0 0
        %1180 = vmatmul.mubr.bf16.gmra.mxu0 %v329
        %v1181 = vpop.f32.mrf.mxu0
        %v1182 = vadd.f32 %v1079, %v1181
        %v1183 = vpop.f32.mrf.mxu0
        %v1184 = vpop.f32.mrf.mxu0
        %v1185 = vadd.f32 %v1082, %v1184
        %v1186 = vpop.f32.mrf.mxu0
        %1187 = vmatprep.mubr.bf16.mxu0 0
        %1188 = vmatmul.mubr.bf16.gmra.mxu0 %v332
        %v1189 = vpop.f32.mrf.mxu0
        %v1190 = vadd.f32 %v1087, %v1189
        %v1191 = vpop.f32.mrf.mxu0
        %v1192 = vpop.f32.mrf.mxu0
        %v1193 = vadd.f32 %v1090, %v1192
        %v1194 = vpop.f32.mrf.mxu0
        %1195 = vmatprep.mubr.bf16.mxu0 0
        %1196 = vmatmul.mubr.bf16.gmra.mxu0 %v335
        %v1197 = vpop.f32.mrf.mxu0
        %v1198 = vadd.f32 %v1095, %v1197
        %v1199 = vpop.f32.mrf.mxu0
        %v1200 = vpop.f32.mrf.mxu0
        %v1201 = vadd.f32 %v1098, %v1200
        %v1202 = vpop.f32.mrf.mxu0
        %1203 = vmatprep.mubr.bf16.mxu0 0
        %1204 = vmatmul.mubr.bf16.gmra.mxu0 %v338
        %v1205 = vpop.f32.mrf.mxu0
        %v1206 = vadd.f32 %v1103, %v1205
        %v1207 = vpop.f32.mrf.mxu0
        %v1208 = vpop.f32.mrf.mxu0
        %v1209 = vadd.f32 %v1106, %v1208
        %v1210 = vpop.f32.mrf.mxu0
        %1211 = vmatprep.mubr.bf16.mxu0 0
        %1212 = vmatmul.mubr.bf16.gmra.mxu0 %v341
        %v1213 = vpop.f32.mrf.mxu0
        %v1214 = vadd.f32 %v1111, %v1213
        %v1215 = vpop.f32.mrf.mxu0
        %v1216 = vpop.f32.mrf.mxu0
        %v1217 = vadd.f32 %v1114, %v1216
        %v1218 = vpop.f32.mrf.mxu0
        %1219 = vmatprep.mubr.bf16.mxu0 0
        %1220 = vmatmul.mubr.bf16.gmra.mxu0 %v344
        %v1221 = vpop.f32.mrf.mxu0
        %v1222 = vadd.f32 %v1119, %v1221
        %v1223 = vpop.f32.mrf.mxu0
        %v1224 = vpop.f32.mrf.mxu0
        %v1225 = vadd.f32 %v1122, %v1224
        %v1226 = vpop.f32.mrf.mxu0
        %1227 = vmatprep.mubr.bf16.mxu0 0
        %1228 = vmatmul.mubr.bf16.gmra.mxu0 %v347
        %v1229 = vpop.f32.mrf.mxu0
        %v1230 = vadd.f32 %v1127, %v1229
        %v1231 = vpop.f32.mrf.mxu0
        %v1232 = vpop.f32.mrf.mxu0
        %v1233 = vadd.f32 %v1130, %v1232
        %v1234 = vpop.f32.mrf.mxu0
        %1235 = vdwg.mxu0
        %s1236 = scalar_lea.vmem %s248, 64
        %v1237 = vld [vmem:[%s1236] sm:$0xf]
        %v1238 = vld [vmem:[%s1236 + $0x4] sm:$0xf]
        %v1241 = vunpack.c.l.b16 %v1237
        %v1242 = vunpack.c.l.b16 %v1238
        %v1243 = vpack.c.b16 %v1242, %v1241
        %1245 = vmatprep.subr.bf16.mxu0 0
        %1246 = vmatpush1.bf16.msra.mxu0 0
        %1247 = vmatprep.subr.bf16.mxu0 0
        %1248 = vmatpush1.bf16.msra.mxu0 0
        %1249 = vmatprep.subr.bf16.mxu0 0
        %1250 = vmatpush1.bf16.msra.mxu0 0
        %1251 = vmatprep.subr.bf16.mxu0 0
        %1252 = vmatpush1.bf16.msra.mxu0 0
        %1253 = vmatprep.subr.bf16.mxu0 0
        %1254 = vmatpush1.bf16.msra.mxu0 0
        %1255 = vmatprep.subr.bf16.mxu0 0
        %1256 = vmatpush1.bf16.msra.mxu0 0
        %1257 = vmatprep.subr.bf16.mxu0 0
        %1258 = vmatpush1.bf16.msra.mxu0 0
        %1259 = vmatprep.subr.bf16.mxu0 0
        %1260 = vmatpush1.bf16.msra.mxu0 %v1243
        %1261 = vmatprep.subr.bf16.mxu0 0
        %1262 = vmatpush2.bf16.msra.mxu0 0
        %1263 = vmatprep.subr.bf16.mxu0 0
        %1264 = vmatpush2.bf16.msra.mxu0 0
        %1265 = vmatprep.subr.bf16.mxu0 0
        %1266 = vmatpush2.bf16.msra.mxu0 0
        %1267 = vmatprep.subr.bf16.mxu0 0
        %1268 = vmatpush2.bf16.msra.mxu0 0
        %1269 = vmatprep.subr.bf16.mxu0 0
        %1270 = vmatpush2.bf16.msra.mxu0 0
        %1271 = vmatprep.subr.bf16.mxu0 0
        %1272 = vmatpush2.bf16.msra.mxu0 0
        %1273 = vmatprep.subr.bf16.mxu0 0
        %1274 = vmatpush2.bf16.msra.mxu0 0
        %1275 = vmatprep.subr.bf16.mxu0 0
        %1276 = vmatpush2.bf16.msra.mxu0 0
        %1277 = vmatprep.mubr.bf16.mxu0 0
        %1278 = vmatmul.mubr.bf16.gmra.mxu0 %v332
        %v1279 = vpop.f32.mrf.mxu0
        %v1280 = vadd.f32 0.0, %v1279
        %v1281 = vpop.f32.mrf.mxu0
        %v1282 = vpop.f32.mrf.mxu0
        %v1283 = vadd.f32 0.0, %v1282
        %v1284 = vpop.f32.mrf.mxu0
        %1285 = vmatprep.mubr.bf16.mxu0 0
        %1286 = vmatmul.mubr.bf16.gmra.mxu0 %v335
        %v1287 = vpop.f32.mrf.mxu0
        %v1288 = vadd.f32 0.0, %v1287
        %v1289 = vpop.f32.mrf.mxu0
        %v1290 = vpop.f32.mrf.mxu0
        %v1291 = vadd.f32 0.0, %v1290
        %v1292 = vpop.f32.mrf.mxu0
        %1293 = vmatprep.mubr.bf16.mxu0 0
        %1294 = vmatmul.mubr.bf16.gmra.mxu0 %v338
        %v1295 = vpop.f32.mrf.mxu0
        %v1296 = vadd.f32 0.0, %v1295
        %v1297 = vpop.f32.mrf.mxu0
        %v1298 = vpop.f32.mrf.mxu0
        %v1299 = vadd.f32 0.0, %v1298
        %v1300 = vpop.f32.mrf.mxu0
        %1301 = vmatprep.mubr.bf16.mxu0 0
        %1302 = vmatmul.mubr.bf16.gmra.mxu0 %v341
        %v1303 = vpop.f32.mrf.mxu0
        %v1304 = vadd.f32 0.0, %v1303
        %v1305 = vpop.f32.mrf.mxu0
        %v1306 = vpop.f32.mrf.mxu0
        %v1307 = vadd.f32 0.0, %v1306
        %v1308 = vpop.f32.mrf.mxu0
        %1309 = vmatprep.mubr.bf16.mxu0 0
        %1310 = vmatmul.mubr.bf16.gmra.mxu0 %v344
        %v1311 = vpop.f32.mrf.mxu0
        %v1312 = vadd.f32 0.0, %v1311
        %v1313 = vpop.f32.mrf.mxu0
        %v1314 = vpop.f32.mrf.mxu0
        %v1315 = vadd.f32 0.0, %v1314
        %v1316 = vpop.f32.mrf.mxu0
        %1317 = vmatprep.mubr.bf16.mxu0 0
        %1318 = vmatmul.mubr.bf16.gmra.mxu0 %v347
        %v1319 = vpop.f32.mrf.mxu0
        %v1320 = vadd.f32 0.0, %v1319
        %v1321 = vpop.f32.mrf.mxu0
        %v1322 = vpop.f32.mrf.mxu0
        %v1323 = vadd.f32 0.0, %v1322
        %v1324 = vpop.f32.mrf.mxu0
        %1325 = vmatprep.mubr.bf16.mxu0 0
        %1326 = vmatmul.mubr.bf16.gmra.mxu0 %v350
        %v1327 = vpop.f32.mrf.mxu0
        %v1328 = vadd.f32 0.0, %v1327
        %v1329 = vpop.f32.mrf.mxu0
        %v1330 = vpop.f32.mrf.mxu0
        %v1331 = vadd.f32 0.0, %v1330
        %v1332 = vpop.f32.mrf.mxu0
        %1333 = vmatprep.mubr.bf16.mxu0 0
        %1334 = vmatmul.mubr.bf16.gmra.mxu0 %v575
        %v1335 = vpop.f32.mrf.mxu0
        %v1336 = vadd.f32 0.0, %v1335
        %v1337 = vpop.f32.mrf.mxu0
        %v1338 = vpop.f32.mrf.mxu0
        %v1339 = vadd.f32 0.0, %v1338
        %v1340 = vpop.f32.mrf.mxu0
        %1341 = vdwg.mxu0
        %v1342 = vadd.f32 %v1174, %v1280
        %v1343 = vadd.f32 %v1177, %v1283
        %v1344 = vadd.f32 %v1182, %v1288
        %v1345 = vadd.f32 %v1185, %v1291
        %v1346 = vadd.f32 %v1190, %v1296
        %v1347 = vadd.f32 %v1193, %v1299
        %v1348 = vadd.f32 %v1198, %v1304
        %v1349 = vadd.f32 %v1201, %v1307
        %v1350 = vadd.f32 %v1206, %v1312
        %v1351 = vadd.f32 %v1209, %v1315
        %v1352 = vadd.f32 %v1214, %v1320
        %v1353 = vadd.f32 %v1217, %v1323
        %v1354 = vadd.f32 %v1222, %v1328
        %v1355 = vadd.f32 %v1225, %v1331
        %v1356 = vadd.f32 %v1230, %v1336
        %v1357 = vadd.f32 %v1233, %v1339
        %v1358 = vrot.slane %v674, 7
        %v1359 = vrot.slane %v675, 7
        %v1360 = vrot.slane %v676, 7
        %v1361 = vrot.slane %v677, 7
        %v1362 = vrot.slane %v678, 7
        %v1363 = vrot.slane %v679, 7
        %v1364 = vrot.slane %v680, 7
        %v1365 = vrot.slane %v681, 7
        %v1366 = vrot.slane %v682, 7
        %v1367 = vrot.slane %v683, 7
        %v1368 = vrot.slane %v684, 7
        %v1369 = vrot.slane %v685, 7
        %v1370 = vrot.slane %v686, 7
        %v1371 = vrot.slane %v687, 7
        %v1372 = vrot.slane %v688, 7
        %v1373 = vrot.slane %v689, 7
        %v1374 = vlaneseq
        %v1375 = vshrl.u32 %v1374, 7
        %vm1376 = vcmp.lt.s32.totalorder %v1375, 1
        %v1377 = vsel %vm1376, %v1372, %v1373
        %v1378 = vsel %vm1376, %v1371, %v1372
        %v1379 = vsel %vm1376, %v1370, %v1371
        %v1380 = vsel %vm1376, %v1369, %v1370
        %v1381 = vsel %vm1376, %v1368, %v1369
        %v1382 = vsel %vm1376, %v1367, %v1368
        %v1383 = vsel %vm1376, %v1366, %v1367
        %v1384 = vsel %vm1376, %v1365, %v1366
        %v1385 = vsel %vm1376, %v1364, %v1365
        %v1386 = vsel %vm1376, %v1363, %v1364
        %v1387 = vsel %vm1376, %v1362, %v1363
        %v1388 = vsel %vm1376, %v1361, %v1362
        %v1389 = vsel %vm1376, %v1360, %v1361
        %v1390 = vsel %vm1376, %v1359, %v1360
        %v1391 = vsel %vm1376, %v1358, %v1359
        %v1392 = vsel %vm1376, %v1373, %v1358
        %v1393 = vadd.f32 %v1392, %v1008
        %v1394 = vadd.f32 %v1391, %v1009
        %v1395 = vadd.f32 %v1390, %v1010
        %v1396 = vadd.f32 %v1389, %v1011
        %v1397 = vadd.f32 %v1388, %v1012
        %v1398 = vadd.f32 %v1387, %v1013
        %v1399 = vadd.f32 %v1386, %v1014
        %v1400 = vadd.f32 %v1385, %v1015
        %v1401 = vadd.f32 %v1384, %v1016
        %v1402 = vadd.f32 %v1383, %v1017
        %v1403 = vadd.f32 %v1382, %v1018
        %v1404 = vadd.f32 %v1381, %v1019
        %v1405 = vadd.f32 %v1380, %v1020
        %v1406 = vadd.f32 %v1379, %v1021
        %v1407 = vadd.f32 %v1378, %v1022
        %v1408 = vadd.f32 %v1377, %v1023
        %v1409 = vrot.slane %v1342, 1
        %v1410 = vrot.slane %v1343, 1
        %v1411 = vrot.slane %v1344, 1
        %v1412 = vrot.slane %v1345, 1
        %v1413 = vrot.slane %v1346, 1
        %v1414 = vrot.slane %v1347, 1
        %v1415 = vrot.slane %v1348, 1
        %v1416 = vrot.slane %v1349, 1
        %v1417 = vrot.slane %v1350, 1
        %v1418 = vrot.slane %v1351, 1
        %v1419 = vrot.slane %v1352, 1
        %v1420 = vrot.slane %v1353, 1
        %v1421 = vrot.slane %v1354, 1
        %v1422 = vrot.slane %v1355, 1
        %v1423 = vrot.slane %v1356, 1
        %v1424 = vrot.slane %v1357, 1
        %vm1425 = vcmp.lt.s32.totalorder %v1375, 7
        %v1426 = vsel %vm1425, %v1423, %v1424
        %v1427 = vsel %vm1425, %v1422, %v1423
        %v1428 = vsel %vm1425, %v1421, %v1422
        %v1429 = vsel %vm1425, %v1420, %v1421
        %v1430 = vsel %vm1425, %v1419, %v1420
        %v1431 = vsel %vm1425, %v1418, %v1419
        %v1432 = vsel %vm1425, %v1417, %v1418
        %v1433 = vsel %vm1425, %v1416, %v1417
        %v1434 = vsel %vm1425, %v1415, %v1416
        %v1435 = vsel %vm1425, %v1414, %v1415
        %v1436 = vsel %vm1425, %v1413, %v1414
        %v1437 = vsel %vm1425, %v1412, %v1413
        %v1438 = vsel %vm1425, %v1411, %v1412
        %v1439 = vsel %vm1425, %v1410, %v1411
        %v1440 = vsel %vm1425, %v1409, %v1410
        %v1441 = vsel %vm1425, %v1424, %v1409
        %v1442 = vadd.f32 %v1393, %v1440
        %v1443 = vadd.f32 %v1394, %v1439
        %v1444 = vadd.f32 %v1395, %v1438
        %v1445 = vadd.f32 %v1396, %v1437
        %v1446 = vadd.f32 %v1397, %v1436
        %v1447 = vadd.f32 %v1398, %v1435
        %v1448 = vadd.f32 %v1399, %v1434
        %v1449 = vadd.f32 %v1400, %v1433
        %v1450 = vadd.f32 %v1401, %v1432
        %v1451 = vadd.f32 %v1402, %v1431
        %v1452 = vadd.f32 %v1403, %v1430
        %v1453 = vadd.f32 %v1404, %v1429
        %v1454 = vadd.f32 %v1405, %v1428
        %v1455 = vadd.f32 %v1406, %v1427
        %v1456 = vadd.f32 %v1407, %v1426
        %v1457 = vadd.f32 %v1408, %v1441
        %v1458 = vld [vmem:[%s251] sm:$0x1]
        %v1459 = vld [vmem:[%s254] sm:$0x1]
        %v1461 = vlaneseq
        %v1462 = vshrl.u32 %v1461, 7
        %v1463 = vsub.s32 0, %v1462
        %v1464 = vrot.slane %v1458, %v1463
        %v1466 = vmul.f32 %v1442, %v1464
        %v1467 = vmul.f32 %v1443, %v1464
        %v1468 = vmul.f32 %v1444, %v1464
        %v1469 = vmul.f32 %v1445, %v1464
        %v1470 = vmul.f32 %v1446, %v1464
        %v1471 = vmul.f32 %v1447, %v1464
        %v1472 = vmul.f32 %v1448, %v1464
        %v1473 = vmul.f32 %v1449, %v1464
        %v1474 = vmul.f32 %v1450, %v1464
        %v1475 = vmul.f32 %v1451, %v1464
        %v1476 = vmul.f32 %v1452, %v1464
        %v1477 = vmul.f32 %v1453, %v1464
        %v1478 = vmul.f32 %v1454, %v1464
        %v1479 = vmul.f32 %v1455, %v1464
        %v1480 = vmul.f32 %v1456, %v1464
        %v1481 = vmul.f32 %v1457, %v1464
        %v1483 = vlaneseq
        %v1484 = vshrl.u32 %v1483, 7
        %v1485 = vsub.s32 0, %v1484
        %v1486 = vrot.slane %v1459, %v1485
        %v1488 = vadd.f32 %v1466, %v1486
        %v1489 = vadd.f32 %v1467, %v1486
        %v1490 = vadd.f32 %v1468, %v1486
        %v1491 = vadd.f32 %v1469, %v1486
        %v1492 = vadd.f32 %v1470, %v1486
        %v1493 = vadd.f32 %v1471, %v1486
        %v1494 = vadd.f32 %v1472, %v1486
        %v1495 = vadd.f32 %v1473, %v1486
        %v1496 = vadd.f32 %v1474, %v1486
        %v1497 = vadd.f32 %v1475, %v1486
        %v1498 = vadd.f32 %v1476, %v1486
        %v1499 = vadd.f32 %v1477, %v1486
        %v1500 = vadd.f32 %v1478, %v1486
        %v1501 = vadd.f32 %v1479, %v1486
        %v1502 = vadd.f32 %v1480, %v1486
        %v1503 = vadd.f32 %v1481, %v1486
        %v1504 = vmax.f32 %v1488, 0.0
        %v1505 = vmax.f32 %v1489, 0.0
        %v1506 = vmax.f32 %v1490, 0.0
        %v1507 = vmax.f32 %v1491, 0.0
        %v1508 = vmax.f32 %v1492, 0.0
        %v1509 = vmax.f32 %v1493, 0.0
        %v1510 = vmax.f32 %v1494, 0.0
        %v1511 = vmax.f32 %v1495, 0.0
        %v1512 = vmax.f32 %v1496, 0.0
        %v1513 = vmax.f32 %v1497, 0.0
        %v1514 = vmax.f32 %v1498, 0.0
        %v1515 = vmax.f32 %v1499, 0.0
        %v1516 = vmax.f32 %v1500, 0.0
        %v1517 = vmax.f32 %v1501, 0.0
        %v1518 = vmax.f32 %v1502, 0.0
        %v1519 = vmax.f32 %v1503, 0.0
        %v1520 = vadd.s32 %v1375, 8
        %v1521 = vadd.s32 %v1375, 16
        %v1522 = vadd.s32 %v1375, 24
        %v1523 = vadd.s32 %v1375, 32
        %v1524 = vadd.s32 %v1375, 40
        %v1525 = vadd.s32 %v1375, 48
        %v1526 = vadd.s32 %v1375, 56
        %v1527 = vadd.s32 %v1375, 64
        %v1528 = vadd.s32 %v1375, 72
        %v1529 = vadd.s32 %v1375, 80
        %v1530 = vadd.s32 %v1375, 88
        %v1531 = vadd.s32 %v1375, 96
        %v1532 = vadd.s32 %v1375, 104
        %v1533 = vadd.s32 %v1375, 112
        %v1534 = vadd.s32 %v1375, 120
        %vm1535 = vcmp.lt.s32.totalorder %v1375, 0
        %v1536 = vsub.s32 0, %v1375
        %v1537 = vsel %vm1535, %v1536, %v1375
        %v1538 = vshrl.u32 %v1537, 4
        %v1539 = vand.u32 %v1537, 15
        %v1540 = vsub.s32 0, %v1539
        %v1541 = vsel %vm1535, %v1540, %v1539
        %vm1542 = vcmp.lt.s32.totalorder %v1520, 0
        %v1543 = vsub.s32 0, %v1520
        %v1544 = vsel %vm1542, %v1543, %v1520
        %v1545 = vshrl.u32 %v1544, 4
        %v1546 = vand.u32 %v1544, 15
        %v1547 = vsub.s32 0, %v1546
        %v1548 = vsel %vm1542, %v1547, %v1546
        %vm1549 = vcmp.lt.s32.totalorder %v1521, 0
        %v1550 = vsub.s32 0, %v1521
        %v1551 = vsel %vm1549, %v1550, %v1521
        %v1552 = vshrl.u32 %v1551, 4
        %v1553 = vand.u32 %v1551, 15
        %v1554 = vsub.s32 0, %v1553
        %v1555 = vsel %vm1549, %v1554, %v1553
        %vm1556 = vcmp.lt.s32.totalorder %v1522, 0
        %v1557 = vsub.s32 0, %v1522
        %v1558 = vsel %vm1556, %v1557, %v1522
        %v1559 = vshrl.u32 %v1558, 4
        %v1560 = vand.u32 %v1558, 15
        %v1561 = vsub.s32 0, %v1560
        %v1562 = vsel %vm1556, %v1561, %v1560
        %vm1563 = vcmp.lt.s32.totalorder %v1523, 0
        %v1564 = vsub.s32 0, %v1523
        %v1565 = vsel %vm1563, %v1564, %v1523
        %v1566 = vshrl.u32 %v1565, 4
        %v1567 = vand.u32 %v1565, 15
        %v1568 = vsub.s32 0, %v1567
        %v1569 = vsel %vm1563, %v1568, %v1567
        %vm1570 = vcmp.lt.s32.totalorder %v1524, 0
        %v1571 = vsub.s32 0, %v1524
        %v1572 = vsel %vm1570, %v1571, %v1524
        %v1573 = vshrl.u32 %v1572, 4
        %v1574 = vand.u32 %v1572, 15
        %v1575 = vsub.s32 0, %v1574
        %v1576 = vsel %vm1570, %v1575, %v1574
        %vm1577 = vcmp.lt.s32.totalorder %v1525, 0
        %v1578 = vsub.s32 0, %v1525
        %v1579 = vsel %vm1577, %v1578, %v1525
        %v1580 = vshrl.u32 %v1579, 4
        %v1581 = vand.u32 %v1579, 15
        %v1582 = vsub.s32 0, %v1581
        %v1583 = vsel %vm1577, %v1582, %v1581
        %vm1584 = vcmp.lt.s32.totalorder %v1526, 0
        %v1585 = vsub.s32 0, %v1526
        %v1586 = vsel %vm1584, %v1585, %v1526
        %v1587 = vshrl.u32 %v1586, 4
        %v1588 = vand.u32 %v1586, 15
        %v1589 = vsub.s32 0, %v1588
        %v1590 = vsel %vm1584, %v1589, %v1588
        %vm1591 = vcmp.lt.s32.totalorder %v1527, 0
        %v1592 = vsub.s32 0, %v1527
        %v1593 = vsel %vm1591, %v1592, %v1527
        %v1594 = vshrl.u32 %v1593, 4
        %v1595 = vand.u32 %v1593, 15
        %v1596 = vsub.s32 0, %v1595
        %v1597 = vsel %vm1591, %v1596, %v1595
        %vm1598 = vcmp.lt.s32.totalorder %v1528, 0
        %v1599 = vsub.s32 0, %v1528
        %v1600 = vsel %vm1598, %v1599, %v1528
        %v1601 = vshrl.u32 %v1600, 4
        %v1602 = vand.u32 %v1600, 15
        %v1603 = vsub.s32 0, %v1602
        %v1604 = vsel %vm1598, %v1603, %v1602
        %vm1605 = vcmp.lt.s32.totalorder %v1529, 0
        %v1606 = vsub.s32 0, %v1529
        %v1607 = vsel %vm1605, %v1606, %v1529
        %v1608 = vshrl.u32 %v1607, 4
        %v1609 = vand.u32 %v1607, 15
        %v1610 = vsub.s32 0, %v1609
        %v1611 = vsel %vm1605, %v1610, %v1609
        %vm1612 = vcmp.lt.s32.totalorder %v1530, 0
        %v1613 = vsub.s32 0, %v1530
        %v1614 = vsel %vm1612, %v1613, %v1530
        %v1615 = vshrl.u32 %v1614, 4
        %v1616 = vand.u32 %v1614, 15
        %v1617 = vsub.s32 0, %v1616
        %v1618 = vsel %vm1612, %v1617, %v1616
        %vm1619 = vcmp.lt.s32.totalorder %v1531, 0
        %v1620 = vsub.s32 0, %v1531
        %v1621 = vsel %vm1619, %v1620, %v1531
        %v1622 = vshrl.u32 %v1621, 4
        %v1623 = vand.u32 %v1621, 15
        %v1624 = vsub.s32 0, %v1623
        %v1625 = vsel %vm1619, %v1624, %v1623
        %vm1626 = vcmp.lt.s32.totalorder %v1532, 0
        %v1627 = vsub.s32 0, %v1532
        %v1628 = vsel %vm1626, %v1627, %v1532
        %v1629 = vshrl.u32 %v1628, 4
        %v1630 = vand.u32 %v1628, 15
        %v1631 = vsub.s32 0, %v1630
        %v1632 = vsel %vm1626, %v1631, %v1630
        %vm1633 = vcmp.lt.s32.totalorder %v1533, 0
        %v1634 = vsub.s32 0, %v1533
        %v1635 = vsel %vm1633, %v1634, %v1533
        %v1636 = vshrl.u32 %v1635, 4
        %v1637 = vand.u32 %v1635, 15
        %v1638 = vsub.s32 0, %v1637
        %v1639 = vsel %vm1633, %v1638, %v1637
        %vm1640 = vcmp.lt.s32.totalorder %v1534, 0
        %v1641 = vsub.s32 0, %v1534
        %v1642 = vsel %vm1640, %v1641, %v1534
        %v1643 = vshrl.u32 %v1642, 4
        %v1644 = vand.u32 %v1642, 15
        %v1645 = vsub.s32 0, %v1644
        %v1646 = vsel %vm1640, %v1645, %v1644
        %vm1647 = vcmp.ne.s32.totalorder %v1541, 0
        %vm1648 = vcmp.ne.s32.totalorder %v1548, 0
        %vm1649 = vcmp.ne.s32.totalorder %v1555, 0
        %vm1650 = vcmp.ne.s32.totalorder %v1562, 0
        %vm1651 = vcmp.ne.s32.totalorder %v1569, 0
        %vm1652 = vcmp.ne.s32.totalorder %v1576, 0
        %vm1653 = vcmp.ne.s32.totalorder %v1583, 0
        %vm1654 = vcmp.ne.s32.totalorder %v1590, 0
        %vm1655 = vcmp.ne.s32.totalorder %v1597, 0
        %vm1656 = vcmp.ne.s32.totalorder %v1604, 0
        %vm1657 = vcmp.ne.s32.totalorder %v1611, 0
        %vm1658 = vcmp.ne.s32.totalorder %v1618, 0
        %vm1659 = vcmp.ne.s32.totalorder %v1625, 0
        %vm1660 = vcmp.ne.s32.totalorder %v1632, 0
        %vm1661 = vcmp.ne.s32.totalorder %v1639, 0
        %vm1662 = vcmp.ne.s32.totalorder %v1646, 0
        %vm1663 = vcmp.lt.s32.totalorder %v1541, 0
        %vm1664 = vcmp.lt.s32.totalorder %v1548, 0
        %vm1665 = vcmp.lt.s32.totalorder %v1555, 0
        %vm1666 = vcmp.lt.s32.totalorder %v1562, 0
        %vm1667 = vcmp.lt.s32.totalorder %v1569, 0
        %vm1668 = vcmp.lt.s32.totalorder %v1576, 0
        %vm1669 = vcmp.lt.s32.totalorder %v1583, 0
        %vm1670 = vcmp.lt.s32.totalorder %v1590, 0
        %vm1671 = vcmp.lt.s32.totalorder %v1597, 0
        %vm1672 = vcmp.lt.s32.totalorder %v1604, 0
        %vm1673 = vcmp.lt.s32.totalorder %v1611, 0
        %vm1674 = vcmp.lt.s32.totalorder %v1618, 0
        %vm1675 = vcmp.lt.s32.totalorder %v1625, 0
        %vm1676 = vcmp.lt.s32.totalorder %v1632, 0
        %vm1677 = vcmp.lt.s32.totalorder %v1639, 0
        %vm1678 = vcmp.lt.s32.totalorder %v1646, 0
        %vm1679 = vmand %vm1663, %vm1647
        %vm1680 = vmand %vm1664, %vm1648
        %vm1681 = vmand %vm1665, %vm1649
        %vm1682 = vmand %vm1666, %vm1650
        %vm1683 = vmand %vm1667, %vm1651
        %vm1684 = vmand %vm1668, %vm1652
        %vm1685 = vmand %vm1669, %vm1653
        %vm1686 = vmand %vm1670, %vm1654
        %vm1687 = vmand %vm1671, %vm1655
        %vm1688 = vmand %vm1672, %vm1656
        %vm1689 = vmand %vm1673, %vm1657
        %vm1690 = vmand %vm1674, %vm1658
        %vm1691 = vmand %vm1675, %vm1659
        %vm1692 = vmand %vm1676, %vm1660
        %vm1693 = vmand %vm1677, %vm1661
        %vm1694 = vmand %vm1678, %vm1662
        %v1695 = vadd.s32 %v1541, 16
        %v1696 = vadd.s32 %v1548, 16
        %v1697 = vadd.s32 %v1555, 16
        %v1698 = vadd.s32 %v1562, 16
        %v1699 = vadd.s32 %v1569, 16
        %v1700 = vadd.s32 %v1576, 16
        %v1701 = vadd.s32 %v1583, 16
        %v1702 = vadd.s32 %v1590, 16
        %v1703 = vadd.s32 %v1597, 16
        %v1704 = vadd.s32 %v1604, 16
        %v1705 = vadd.s32 %v1611, 16
        %v1706 = vadd.s32 %v1618, 16
        %v1707 = vadd.s32 %v1625, 16
        %v1708 = vadd.s32 %v1632, 16
        %v1709 = vadd.s32 %v1639, 16
        %v1710 = vadd.s32 %v1646, 16
        %v1711 = vsel %vm1679, %v1695, %v1541
        %v1712 = vsel %vm1680, %v1696, %v1548
        %v1713 = vsel %vm1681, %v1697, %v1555
        %v1714 = vsel %vm1682, %v1698, %v1562
        %v1715 = vsel %vm1683, %v1699, %v1569
        %v1716 = vsel %vm1684, %v1700, %v1576
        %v1717 = vsel %vm1685, %v1701, %v1583
        %v1718 = vsel %vm1686, %v1702, %v1590
        %v1719 = vsel %vm1687, %v1703, %v1597
        %v1720 = vsel %vm1688, %v1704, %v1604
        %v1721 = vsel %vm1689, %v1705, %v1611
        %v1722 = vsel %vm1690, %v1706, %v1618
        %v1723 = vsel %vm1691, %v1707, %v1625
        %v1724 = vsel %vm1692, %v1708, %v1632
        %v1725 = vsel %vm1693, %v1709, %v1639
        %v1726 = vsel %vm1694, %v1710, %v1646
        %vm1727 = vcmp.ge.s32.totalorder %v1711, 1
        %vm1728 = vcmp.ge.s32.totalorder %v1712, 1
        %vm1729 = vcmp.ge.s32.totalorder %v1713, 1
        %vm1730 = vcmp.ge.s32.totalorder %v1714, 1
        %vm1731 = vcmp.ge.s32.totalorder %v1715, 1
        %vm1732 = vcmp.ge.s32.totalorder %v1716, 1
        %vm1733 = vcmp.ge.s32.totalorder %v1717, 1
        %vm1734 = vcmp.ge.s32.totalorder %v1718, 1
        %vm1735 = vcmp.ge.s32.totalorder %v1719, 1
        %vm1736 = vcmp.ge.s32.totalorder %v1720, 1
        %vm1737 = vcmp.ge.s32.totalorder %v1721, 1
        %vm1738 = vcmp.ge.s32.totalorder %v1722, 1
        %vm1739 = vcmp.ge.s32.totalorder %v1723, 1
        %vm1740 = vcmp.ge.s32.totalorder %v1724, 1
        %vm1741 = vcmp.ge.s32.totalorder %v1725, 1
        %vm1742 = vcmp.ge.s32.totalorder %v1726, 1
        %vm1743 = vcmp.le.s32.totalorder %v1711, 8
        %vm1744 = vcmp.le.s32.totalorder %v1712, 8
        %vm1745 = vcmp.le.s32.totalorder %v1713, 8
        %vm1746 = vcmp.le.s32.totalorder %v1714, 8
        %vm1747 = vcmp.le.s32.totalorder %v1715, 8
        %vm1748 = vcmp.le.s32.totalorder %v1716, 8
        %vm1749 = vcmp.le.s32.totalorder %v1717, 8
        %vm1750 = vcmp.le.s32.totalorder %v1718, 8
        %vm1751 = vcmp.le.s32.totalorder %v1719, 8
        %vm1752 = vcmp.le.s32.totalorder %v1720, 8
        %vm1753 = vcmp.le.s32.totalorder %v1721, 8
        %vm1754 = vcmp.le.s32.totalorder %v1722, 8
        %vm1755 = vcmp.le.s32.totalorder %v1723, 8
        %vm1756 = vcmp.le.s32.totalorder %v1724, 8
        %vm1757 = vcmp.le.s32.totalorder %v1725, 8
        %vm1758 = vcmp.le.s32.totalorder %v1726, 8
        %vm1759 = vmand %vm1727, %vm1743
        %vm1760 = vmand %vm1728, %vm1744
        %vm1761 = vmand %vm1729, %vm1745
        %vm1762 = vmand %vm1730, %vm1746
        %vm1763 = vmand %vm1731, %vm1747
        %vm1764 = vmand %vm1732, %vm1748
        %vm1765 = vmand %vm1733, %vm1749
        %vm1766 = vmand %vm1734, %vm1750
        %vm1767 = vmand %vm1735, %vm1751
        %vm1768 = vmand %vm1736, %vm1752
        %vm1769 = vmand %vm1737, %vm1753
        %vm1770 = vmand %vm1738, %vm1754
        %vm1771 = vmand %vm1739, %vm1755
        %vm1772 = vmand %vm1740, %vm1756
        %vm1773 = vmand %vm1741, %vm1757
        %vm1774 = vmand %vm1742, %vm1758
        %v1775 = vsel %vm1759, 1, 0
        %v1776 = vsel %vm1760, 1, 0
        %v1777 = vsel %vm1761, 1, 0
        %v1778 = vsel %vm1762, 1, 0
        %v1779 = vsel %vm1763, 1, 0
        %v1780 = vsel %vm1764, 1, 0
        %v1781 = vsel %vm1765, 1, 0
        %v1782 = vsel %vm1766, 1, 0
        %v1783 = vsel %vm1767, 1, 0
        %v1784 = vsel %vm1768, 1, 0
        %v1785 = vsel %vm1769, 1, 0
        %v1786 = vsel %vm1770, 1, 0
        %v1787 = vsel %vm1771, 1, 0
        %v1788 = vsel %vm1772, 1, 0
        %v1789 = vsel %vm1773, 1, 0
        %v1790 = vsel %vm1774, 1, 0
        %v1791 = vcvt.s32.f32 %v1775
        %v1792 = vcvt.s32.f32 %v1776
        %v1793 = vcvt.s32.f32 %v1777
        %v1794 = vcvt.s32.f32 %v1778
        %v1795 = vcvt.s32.f32 %v1779
        %v1796 = vcvt.s32.f32 %v1780
        %v1797 = vcvt.s32.f32 %v1781
        %v1798 = vcvt.s32.f32 %v1782
        %v1799 = vcvt.s32.f32 %v1783
        %v1800 = vcvt.s32.f32 %v1784
        %v1801 = vcvt.s32.f32 %v1785
        %v1802 = vcvt.s32.f32 %v1786
        %v1803 = vcvt.s32.f32 %v1787
        %v1804 = vcvt.s32.f32 %v1788
        %v1805 = vcvt.s32.f32 %v1789
        %v1806 = vcvt.s32.f32 %v1790
        %v1807 = vmul.f32 %v1504, %v1791
        %v1808 = vmul.f32 %v1505, %v1792
        %v1809 = vmul.f32 %v1506, %v1793
        %v1810 = vmul.f32 %v1507, %v1794
        %v1811 = vmul.f32 %v1508, %v1795
        %v1812 = vmul.f32 %v1509, %v1796
        %v1813 = vmul.f32 %v1510, %v1797
        %v1814 = vmul.f32 %v1511, %v1798
        %v1815 = vmul.f32 %v1512, %v1799
        %v1816 = vmul.f32 %v1513, %v1800
        %v1817 = vmul.f32 %v1514, %v1801
        %v1818 = vmul.f32 %v1515, %v1802
        %v1819 = vmul.f32 %v1516, %v1803
        %v1820 = vmul.f32 %v1517, %v1804
        %v1821 = vmul.f32 %v1518, %v1805
        %v1822 = vmul.f32 %v1519, %v1806
        %1823 = vst [vmem:[%s239] sm:$0xf] 0
        %1824 = vst [vmem:[%s239 + $0x4] sm:$0xf] 0
        %v1825 = vpack.c.bf16 %v1808, %v1807
        %v1826 = vpack.c.bf16 %v1810, %v1809
        %v1827 = vpack.c.bf16 %v1812, %v1811
        %v1828 = vpack.c.bf16 %v1814, %v1813
        %v1829 = vpack.c.bf16 %v1816, %v1815
        %v1830 = vpack.c.bf16 %v1818, %v1817
        %v1831 = vpack.c.bf16 %v1820, %v1819
        %v1832 = vpack.c.bf16 %v1822, %v1821
        %v1841 = vunpack.c.l.b16 %v1825
        %v1842 = vunpack.c.h.b16 %v1825
        %v1843 = vunpack.c.l.b16 %v1826
        %v1844 = vunpack.c.h.b16 %v1826
        %v1845 = vunpack.c.l.b16 %v1827
        %v1846 = vunpack.c.h.b16 %v1827
        %v1847 = vunpack.c.l.b16 %v1828
        %v1848 = vunpack.c.h.b16 %v1828
        %v1849 = vunpack.c.l.b16 %v1829
        %v1850 = vunpack.c.h.b16 %v1829
        %v1851 = vunpack.c.l.b16 %v1830
        %v1852 = vunpack.c.h.b16 %v1830
        %v1853 = vunpack.c.l.b16 %v1831
        %v1854 = vunpack.c.h.b16 %v1831
        %v1855 = vunpack.c.l.b16 %v1832
        %v1856 = vunpack.c.h.b16 %v1832
        %v1857 = vpack.c.b16 %v1841, %v1841
        %v1858 = vpack.c.b16 %v1842, %v1842
        %v1859 = vpack.c.b16 %v1843, %v1843
        %v1860 = vpack.c.b16 %v1844, %v1844
        %v1861 = vpack.c.b16 %v1845, %v1845
        %v1862 = vpack.c.b16 %v1846, %v1846
        %v1863 = vpack.c.b16 %v1847, %v1847
        %v1864 = vpack.c.b16 %v1848, %v1848
        %v1865 = vpack.c.b16 %v1849, %v1849
        %v1866 = vpack.c.b16 %v1850, %v1850
        %v1867 = vpack.c.b16 %v1851, %v1851
        %v1868 = vpack.c.b16 %v1852, %v1852
        %v1869 = vpack.c.b16 %v1853, %v1853
        %v1870 = vpack.c.b16 %v1854, %v1854
        %v1871 = vpack.c.b16 %v1855, %v1855
        %v1872 = vpack.c.b16 %v1856, %v1856
        %1889 = vst [vmem:[%s239 + $0x8] sm:$0xf] %v1857
        %1890 = vst [vmem:[%s239 + $0xc] sm:$0xf] %v1858
        %1891 = vst [vmem:[%s239 + $0x10] sm:$0xf] %v1859
        %1892 = vst [vmem:[%s239 + $0x14] sm:$0xf] %v1860
        %1893 = vst [vmem:[%s239 + $0x18] sm:$0xf] %v1861
        %1894 = vst [vmem:[%s239 + $0x1c] sm:$0xf] %v1862
        %1895 = vst [vmem:[%s239 + $0x20] sm:$0xf] %v1863
        %1896 = vst [vmem:[%s239 + $0x24] sm:$0xf] %v1864
        %1897 = vst [vmem:[%s239 + $0x28] sm:$0xf] %v1865
        %1898 = vst [vmem:[%s239 + $0x2c] sm:$0xf] %v1866
        %1899 = vst [vmem:[%s239 + $0x30] sm:$0xf] %v1867
        %1900 = vst [vmem:[%s239 + $0x34] sm:$0xf] %v1868
        %1901 = vst [vmem:[%s239 + $0x38] sm:$0xf] %v1869
        %1902 = vst [vmem:[%s239 + $0x3c] sm:$0xf] %v1870
        %1903 = vst [vmem:[%s239 + $0x40] sm:$0xf] %v1871
        %1904 = vst [vmem:[%s239 + $0x44] sm:$0xf] %v1872
        %1905 = vst [vmem:[%s239 + $0x48] sm:$0xf] 0
        %1906 = vst [vmem:[%s239 + $0x4c] sm:$0xf] 0
        %s1907 = sand.u32 %s144, 1
        %s1908 = scalar_lea.sflag [#allocation3], %s1907
        %s1909 = sand.u32 %s144, 1
        %s1910 = smul.addr %s1909, 80
        %s1911 = scalar_lea.vmem [#allocation2], %s1910
        // Predicated region
        $region37: #{_lambda_.1} parent=35 // pred_check
          %p1912 = pneg %p154
        $region38: #{_lambda_.1} parent=35 // pred_check_branch
          %1914 = sbr.rel (%p1912) target = $region40
        $region39: #{_lambda_.1} parent=35 // pred_region
          %s1916 = ssub.s32 1280, 1280
          %1917 = vsyncadd %s1908, %s1916
          %s1918 = smul.addr %s23, 20
          %s1919 = sadd.s32 %s22, %s1918
          %s1920 = smul.addr %s1919, 64
          %s1921 = scalar_lea.hbm %s4, %s1920
          %s1922 = sshll.u32 %s1911, 4
          %s1923 = int_to_ptr.vmem [resolvable:$true] %s1922
          %1928 = dma.vmem_to_hbm [thread:$0]  %s1923, 1280, %s1921, %s1908, 64, 64, 4
        $region40: #{_lambda_.1} parent=35 // pred_fallthru
          _
      $region36: #{_lambda_.1} parent=5 // pred_fallthru
        _
      %p1929 = scmp.le.s32.totalorder 2, %s13
      // Predicated region
      $region41: #{_lambda_.1} parent=5 // pred_check
        %p1930 = pneg %p1929
      $region42: #{_lambda_.1} parent=5 // pred_check_branch
        %1932 = sbr.rel (%p1930) target = $region44
      $region43: #{_lambda_.1} parent=5 // pred_region
        %s1933 = ssub.s32 %s13, 2
        // Predicated region
        $region45: #{_lambda_.1} parent=43 // pred_check
          %p1934 = pneg %p160
        $region46: #{_lambda_.1} parent=43 // pred_check_branch
          %1936 = sbr.rel (%p1934) target = $region48
        $region47: #{_lambda_.1} parent=43 // pred_region
          %s1937 = sand.u32 %s145, 1
          %s1938 = scalar_lea.sflag [#allocation3], %s1937
          %s1939 = sand.u32 %s145, 1
          %s1940 = smul.addr %s1939, 80
          %s1941 = scalar_lea.vmem [#allocation2], %s1940
          %1942 = dma.done %s1938, 1280
        $region48: #{_lambda_.1} parent=43 // pred_fallthru
          _
      $region44: #{_lambda_.1} parent=5 // pred_fallthru
        _
    $region6: #{_lambda_.1} parent=1 // loop_footer
      %s17 = sadd.s32 1, %s13
    $region7: #{_lambda_.1} parent=1 // loop_footer_branch
      %12 = sbr.rel target = $region3
    $region8: #{_lambda_.1} parent=1 // loop_exit
      _
    %1943 = vsyncpa [#allocation3], 1
    %s1944 = scalar_lea.sflag [#allocation3], 1
    %1945 = vsyncpa %s1944, 1

</llo_original>
